<compile_context>
chip_gen: v7x
topology: tpu7x:2x2x1
jax: 0.10.0
libtpu: 0.0.40
codegen_flags: <defaults>
</compile_context>

<pallas_src>
import functools

import jax
import jax.numpy as jnp
from jax import lax
from jax.experimental import pallas as pl
from jax.experimental.pallas import tpu as pltpu

NUM_GROUPS = 32
EPS = 1e-6


def _attn_kernel(x_ref, gamma_ref, beta_ref, gsum_ref, gbc_ref,
                 wkv_ref, bkv_ref, wq_ref, bq_ref, wp_ref, bp_ref,
                 *rest, with_attn):
    if with_attn:
        out_ref, attn_ref, kv_s, ab_s = rest
    else:
        out_ref, kv_s, ab_s = rest
        attn_ref = None

    C = wq_ref.shape[0]
    TQ = out_ref.shape[2]
    qi = pl.program_id(1)

    # ---- per-batch setup (GroupNorm affine params + fused K/V projection), at qi == 0 -------
    @pl.when(qi == 0)
    def _init():
        x = x_ref[0]                                        # (C, N)
        N = x.shape[1]
        # lane-axis reduce -> per-channel sum and sum-of-squares (native layout, no reshape)
        s1 = jnp.sum(x, axis=1, keepdims=True)              # (C, 1)
        s2 = jnp.sum(x * x, axis=1, keepdims=True)          # (C, 1)
        inv_cnt = jnp.float32(1.0 / ((C // NUM_GROUPS) * N))
        mean_g = jnp.dot(gsum_ref[...], s1, preferred_element_type=jnp.float32) * inv_cnt
        msq_g = jnp.dot(gsum_ref[...], s2, preferred_element_type=jnp.float32) * inv_cnt
        rstd_g = lax.rsqrt(msq_g - mean_g * mean_g + EPS)   # (G, 1)
        mean_c = jnp.dot(gbc_ref[...], mean_g, preferred_element_type=jnp.float32)  # (C, 1)
        rstd_c = jnp.dot(gbc_ref[...], rstd_g, preferred_element_type=jnp.float32)  # (C, 1)
        scale = gamma_ref[...] * rstd_c                     # (C, 1)
        shift = beta_ref[...] - mean_c * scale              # (C, 1)
        ab_s[0] = scale
        ab_s[1] = shift
        h = x * scale + shift                               # normalized (C, N)
        # fused K/V projection: (2C, C) @ (C, N) -> (2C, N), resident across query blocks
        kv_s[...] = (jnp.dot(wkv_ref[...], h, preferred_element_type=jnp.float32)
                     + bkv_ref[...])

    # ---- per-query-block attention -----------------------------------------------------------
    start = qi * TQ
    if TQ % 128 == 0:
        start = pl.multiple_of(start, 128)
    x_q = x_ref[0, :, pl.ds(start, TQ)]                     # (C, TQ), reused for residual
    h_q = x_q * ab_s[0] + ab_s[1]                           # (C, TQ)

    qscale = jnp.float32(int(C) ** (-0.5))                  # folded into q, not the scores
    q = (jnp.dot(wq_ref[...], h_q, preferred_element_type=jnp.float32)
         + bq_ref[...]) * qscale                            # (C, TQ)

    k = kv_s[0:C, :]                                        # (C, N)
    v = kv_s[C:2 * C, :]                                    # (C, N)

    # s[i, j] = sum_c q[c, i] * k[c, j]   (no explicit q.T materialization)
    s = lax.dot_general(q, k, (((0,), (0,)), ((), ())),
                        preferred_element_type=jnp.float32)  # (TQ, N)
    s = s - jnp.max(s, axis=-1, keepdims=True)               # lane-axis softmax (cheap reduce)
    p = jnp.exp(s)
    p = p * pl.reciprocal(jnp.sum(p, axis=-1, keepdims=True), approx=False)

    if attn_ref is not None:
        # PyTorch returns w_.permute(0, 2, 1); transpose the tile once and reuse it for the
        # value matmul (plain (C,N)@(N,TQ)).
        p_t = p.T                                            # (N, TQ)
        attn_ref[0] = p_t.astype(attn_ref.dtype)
        o = jnp.dot(v, p_t, preferred_element_type=jnp.float32)           # (C, TQ)
    else:
        # fast path: skip the explicit transpose, contract on the N axes directly
        o = lax.dot_general(v, p, (((1,), (1,)), ((), ())),
                            preferred_element_type=jnp.float32)           # (C, TQ)

    o = jnp.dot(wp_ref[...], o, preferred_element_type=jnp.float32) + bp_ref[...]
    out_ref[0] = x_q + o


def attn_block(x, params, *, return_attn=True, attn_dtype=jnp.float32, tq=None):
    """x: (B, C, D, H, W) float32.

    Returns (x + h_, attn) matching the PyTorch module exactly:
      attn[b, j, i] = softmax_j(q_i . k_j * C**-0.5)   (i.e. the permuted weights it returns),
    or just x + h_ when return_attn=False.
    """
    B, C, D, H, W = x.shape
    assert C % NUM_GROUPS == 0, "GroupNorm(32) requires C % 32 == 0"
    N = D * H * W
    G = NUM_GROUPS
    cs = C // G

    if tq is None:
        tq = 128 if N % 128 == 0 else N      # lane-dense query blocks whenever possible
    assert N % tq == 0
    nq = N // tq

    x2 = x.reshape(B, C, N)
    gamma = params["gamma"].reshape(C, 1).astype(jnp.float32)
    beta = params["beta"].reshape(C, 1).astype(jnp.float32)
    wq = params["wq"].astype(jnp.float32)
    bq = params["bq"].reshape(C, 1).astype(jnp.float32)
    wp = params["wp"].astype(jnp.float32)
    bp = params["bp"].reshape(C, 1).astype(jnp.float32)
    # fused K/V projection weights
    wkv = jnp.concatenate([params["wk"], params["wv"]], axis=0).astype(jnp.float32)
    bkv = jnp.concatenate([params["bk"], params["bv"]],
                          axis=0).reshape(2 * C, 1).astype(jnp.float32)
    # tiny group-combine / group-broadcast matrices (replace the in-kernel relayout reshape)
    ch = jnp.arange(C, dtype=jnp.int32)
    gsum = (ch[None, :] // cs ==
            jnp.arange(G, dtype=jnp.int32)[:, None]).astype(jnp.float32)   # (G, C)
    gbc = gsum.T                                                           # (C, G)

    def const(shape):
        return pl.BlockSpec(shape, lambda b, qi: (0, 0))

    in_specs = [
        pl.BlockSpec((1, C, N), lambda b, qi: (b, 0, 0)),   # x: resident per batch element
        const((C, 1)), const((C, 1)),                       # gamma, beta
        const((G, C)), const((C, G)),                       # group sum / broadcast matrices
        const((2 * C, C)), const((2 * C, 1)),               # wkv, bkv
        const((C, C)), const((C, 1)),                       # wq, bq
        const((C, C)), const((C, 1)),                       # wp, bp
    ]

    out_spec_main = pl.BlockSpec((1, C, tq), lambda b, qi: (b, 0, qi))
    if return_attn:
        # attn stored already-permuted: block (1, N, tq), lane-dense in the query axis
        out_shape = (jax.ShapeDtypeStruct((B, C, N), jnp.float32),
                     jax.ShapeDtypeStruct((B, N, N), attn_dtype))
        out_specs = (out_spec_main,
                     pl.BlockSpec((1, N, tq), lambda b, qi: (b, 0, qi)))
    else:
        out_shape = jax.ShapeDtypeStruct((B, C, N), jnp.float32)
        out_specs = out_spec_main

    # explicit scoped-VMEM budget from the actual footprint (+ headroom), clamped for v7x
    f32b = 4
    n_weights = 2 * C + G * C + C * G + 2 * C * C + 2 * C + 2 * (C * C + C)
    n_in = C * N + n_weights
    n_out = C * tq + (N * tq if return_attn else 0)
    n_scratch = 2 * C * N + 2 * C
    n_interm = 4 * tq * N + 6 * C * tq + 2 * C * N
    est = (2 * (n_in + n_out) + n_scratch + n_interm) * f32b
    vmem_limit = int(min(64 * 2 ** 20, max(16 * 2 ** 20, 2 * est)))

    kernel = functools.partial(_attn_kernel, with_attn=return_attn)
    result = pl.pallas_call(
        kernel,
        out_shape=out_shape,
        grid=(B, nq),
        in_specs=in_specs,
        out_specs=out_specs,
        scratch_shapes=[pltpu.VMEM((2 * C, N), jnp.float32),   # resident K / V
                        pltpu.VMEM((2, C, 1), jnp.float32)],   # GroupNorm scale / shift
        compiler_params=pltpu.CompilerParams(
            dimension_semantics=("parallel", "arbitrary"),
            vmem_limit_bytes=vmem_limit),
    )(x2, gamma, beta, gsum, gbc, wkv, bkv, wq, bq, wp, bp)

    if return_attn:
        out2, attn = result
        return out2.reshape(B, C, D, H, W), attn
    return result.reshape(B, C, D, H, W)


def init_params(key, C):
    ks = jax.random.split(key, 10)
    s = 0.1
    return {
        "gamma": 1.0 + s * jax.random.normal(ks[0], (C,), jnp.float32),
        "beta": s * jax.random.normal(ks[1], (C,), jnp.float32),
        "wq": s * jax.random.normal(ks[2], (C, C), jnp.float32),
        "bq": s * jax.random.normal(ks[3], (C,), jnp.float32),
        "wk": s * jax.random.normal(ks[4], (C, C), jnp.float32),
        "bk": s * jax.random.normal(ks[5], (C,), jnp.float32),
        "wv": s * jax.random.normal(ks[6], (C, C), jnp.float32),
        "bv": s * jax.random.normal(ks[7], (C,), jnp.float32),
        "wp": s * jax.random.normal(ks[8], (C, C), jnp.float32),
        "bp": s * jax.random.normal(ks[9], (C,), jnp.float32),
    }


def ref_forward(x, p):
    """Pure-JAX reference mirroring the PyTorch forward (including the permuted attn output)."""
    B, C, D, H, W = x.shape
    cs = C // NUM_GROUPS
    xg = x.reshape(B, NUM_GROUPS, cs, D, H, W)
    mean = xg.mean(axis=(2, 3, 4, 5), keepdims=True)
    var = ((xg - mean) ** 2).mean(axis=(2, 3, 4, 5), keepdims=True)
    hn = ((xg - mean) / jnp.sqrt(var + EPS)).reshape(B, C, D, H, W)
    hn = hn * p["gamma"][None, :, None, None, None] + p["beta"][None, :, None, None, None]
    N = D * H * W
    h2 = hn.reshape(B, C, N)
    q = jnp.einsum("oc,bcn->bon", p["wq"], h2) + p["bq"][None, :, None]
    k = jnp.einsum("oc,bcn->bon", p["wk"], h2) + p["bk"][None, :, None]
    v = jnp.einsum("oc,bcn->bon", p["wv"], h2) + p["bv"][None, :, None]
    w_ = jnp.einsum("bci,bcj->bij", q, k) * (int(C) ** (-0.5))
    w_ = jax.nn.softmax(w_, axis=2)
    o = jnp.einsum("bcj,bij->bci", v, w_)
    o = jnp.einsum("oc,bcn->bon", p["wp"], o) + p["bp"][None, :, None]
    # the module returns w_.permute(0, 2, 1)
    return x + o.reshape(B, C, D, H, W), jnp.transpose(w_, (0, 2, 1))


if __name__ == "__main__":
    key = jax.random.PRNGKey(0)
    kx, kp = jax.random.split(key)

    # C multiple of 32 (GroupNorm groups); N = D*H*W = 256 -> lane-dense, 2 query blocks
    B, C, D, H, W = 2, 64, 2, 8, 16
    x = jax.random.normal(kx, (B, C, D, H, W), jnp.float32)
    params = init_params(kp, C)

    out, attn = attn_block(x, params)
    out = jax.block_until_ready(out)
    attn = jax.block_until_ready(attn)

    ref_out, ref_attn = ref_forward(x, params)
    assert jnp.allclose(out, ref_out, atol=1e-4, rtol=1e-4), "output mismatch"
    assert jnp.allclose(attn, ref_attn, atol=5e-5, rtol=1e-4), "attention mismatch"

    # attention-free fast path (drops the (B, N, N) HBM writeback entirely)
    out_only = attn_block(x, params, return_attn=False)
    out_only = jax.block_until_ready(out_only)
    assert jnp.allclose(out_only, ref_out, atol=1e-4, rtol=1e-4), "no-attn output mismatch"

    print("KERNEL_OK")
</pallas_src>

<mosaic_0001>
module attributes {stable_mosaic.version = 11 : i64} {
  func.func @_attn_kernel(%arg0: i32, %arg1: i32, %arg2: memref<1x64x256xf32, #tpu.memory_space<vmem>>, %arg3: memref<64x1xf32, #tpu.memory_space<vmem>>, %arg4: memref<64x1xf32, #tpu.memory_space<vmem>>, %arg5: memref<32x64xf32, #tpu.memory_space<vmem>>, %arg6: memref<64x32xf32, #tpu.memory_space<vmem>>, %arg7: memref<128x64xf32, #tpu.memory_space<vmem>>, %arg8: memref<128x1xf32, #tpu.memory_space<vmem>>, %arg9: memref<64x64xf32, #tpu.memory_space<vmem>>, %arg10: memref<64x1xf32, #tpu.memory_space<vmem>>, %arg11: memref<64x64xf32, #tpu.memory_space<vmem>>, %arg12: memref<64x1xf32, #tpu.memory_space<vmem>>, %arg13: memref<1x64x128xf32, #tpu.memory_space<vmem>>, %arg14: memref<1x256x128xf32, #tpu.memory_space<vmem>>, %arg15: memref<128x256xf32, #tpu.memory_space<vmem>>, %arg16: memref<2x64x1xf32, #tpu.memory_space<vmem>>) attributes {dimension_semantics = [#tpu.dimension_semantics<parallel>, #tpu.dimension_semantics<arbitrary>], iteration_bounds = array<i64: 2, 2>, scalar_prefetch = 0 : i64, scratch_operands = 2 : i64, tpu.core_type = #tpu.core_type<tc>, window_params = [{transform_indices = @transform_0, window_bounds = array<i64: 1, 64, 256>}, {pipeline_mode = #tpu.pipeline_mode<synchronous>, transform_indices = @transform_1, window_bounds = array<i64: 64, 1>}, {pipeline_mode = #tpu.pipeline_mode<synchronous>, transform_indices = @transform_2, window_bounds = array<i64: 64, 1>}, {pipeline_mode = #tpu.pipeline_mode<synchronous>, transform_indices = @transform_3, window_bounds = array<i64: 32, 64>}, {pipeline_mode = #tpu.pipeline_mode<synchronous>, transform_indices = @transform_4, window_bounds = array<i64: 64, 32>}, {pipeline_mode = #tpu.pipeline_mode<synchronous>, transform_indices = @transform_5, window_bounds = array<i64: 128, 64>}, {pipeline_mode = #tpu.pipeline_mode<synchronous>, transform_indices = @transform_6, window_bounds = array<i64: 128, 1>}, {pipeline_mode = #tpu.pipeline_mode<synchronous>, transform_indices = @transform_7, window_bounds = array<i64: 64, 64>}, {pipeline_mode = #tpu.pipeline_mode<synchronous>, transform_indices = @transform_8, window_bounds = array<i64: 64, 1>}, {pipeline_mode = #tpu.pipeline_mode<synchronous>, transform_indices = @transform_9, window_bounds = array<i64: 64, 64>}, {pipeline_mode = #tpu.pipeline_mode<synchronous>, transform_indices = @transform_10, window_bounds = array<i64: 64, 1>}, {transform_indices = @transform_11, window_bounds = array<i64: 1, 64, 128>}, {transform_indices = @transform_12, window_bounds = array<i64: 1, 256, 128>}]} {
    %c0_i32 = arith.constant 0 : i32
    %0 = arith.cmpi eq, %arg1, %c0_i32 : i32
    %1 = arith.extui %0 : i1 to i32
    %c0_i32_0 = arith.constant 0 : i32
    %2 = arith.cmpi ne, %1, %c0_i32_0 : i32
    scf.if %2 {
      %c0_30 = arith.constant 0 : index
      %c0_31 = arith.constant 0 : index
      %c0_32 = arith.constant 0 : index
      %50 = vector.load %arg2[%c0_30, %c0_31, %c0_32] : memref<1x64x256xf32, #tpu.memory_space<vmem>>, vector<1x64x256xf32>
      %51 = vector.shape_cast %50 : vector<1x64x256xf32> to vector<64x256xf32>
      %cst_33 = arith.constant dense<0.000000e+00> : vector<64xf32>
      %52 = vector.multi_reduction <add>, %51, %cst_33 [1] : vector<64x256xf32> to vector<64xf32>
      %53 = vector.shape_cast %52 : vector<64xf32> to vector<64x1xf32>
      %54 = arith.mulf %51, %51 : vector<64x256xf32>
      %cst_34 = arith.constant dense<0.000000e+00> : vector<64xf32>
      %55 = vector.multi_reduction <add>, %54, %cst_34 [1] : vector<64x256xf32> to vector<64xf32>
      %56 = vector.shape_cast %55 : vector<64xf32> to vector<64x1xf32>
      %c0_35 = arith.constant 0 : index
      %c0_36 = arith.constant 0 : index
      %57 = vector.load %arg5[%c0_35, %c0_36] : memref<32x64xf32, #tpu.memory_space<vmem>>, vector<32x64xf32>
      %cst_37 = arith.constant dense<0.000000e+00> : vector<32x1xf32>
      %58 = tpu.matmul %57, %53, %cst_37 {dimension_numbers = #tpu.dot_dimension_numbers<[1], [0], [0], [1], [0, 0, 1, 1], [], []>} : vector<32x64xf32>, vector<64x1xf32>, vector<32x1xf32> -> vector<32x1xf32>
      %cst_38 = arith.constant 0.001953125 : f32
      %59 = vector.broadcast %cst_38 : f32 to vector<32x1xf32>
      %60 = arith.mulf %58, %59 : vector<32x1xf32>
      %c0_39 = arith.constant 0 : index
      %c0_40 = arith.constant 0 : index
      %61 = vector.load %arg5[%c0_39, %c0_40] : memref<32x64xf32, #tpu.memory_space<vmem>>, vector<32x64xf32>
      %cst_41 = arith.constant dense<0.000000e+00> : vector<32x1xf32>
      %62 = tpu.matmul %61, %56, %cst_41 {dimension_numbers = #tpu.dot_dimension_numbers<[1], [0], [0], [1], [0, 0, 1, 1], [], []>} : vector<32x64xf32>, vector<64x1xf32>, vector<32x1xf32> -> vector<32x1xf32>
      %cst_42 = arith.constant 0.001953125 : f32
      %63 = vector.broadcast %cst_42 : f32 to vector<32x1xf32>
      %64 = arith.mulf %62, %63 : vector<32x1xf32>
      %65 = arith.mulf %60, %60 : vector<32x1xf32>
      %66 = arith.subf %64, %65 : vector<32x1xf32>
      %cst_43 = arith.constant 9.99999997E-7 : f32
      %67 = vector.broadcast %cst_43 : f32 to vector<32x1xf32>
      %68 = arith.addf %66, %67 : vector<32x1xf32>
      %69 = math.rsqrt %68 : vector<32x1xf32>
      %c0_44 = arith.constant 0 : index
      %c0_45 = arith.constant 0 : index
      %70 = vector.load %arg6[%c0_44, %c0_45] : memref<64x32xf32, #tpu.memory_space<vmem>>, vector<64x32xf32>
      %cst_46 = arith.constant dense<0.000000e+00> : vector<64x1xf32>
      %71 = tpu.matmul %70, %60, %cst_46 {dimension_numbers = #tpu.dot_dimension_numbers<[1], [0], [0], [1], [0, 0, 1, 1], [], []>} : vector<64x32xf32>, vector<32x1xf32>, vector<64x1xf32> -> vector<64x1xf32>
      %c0_47 = arith.constant 0 : index
      %c0_48 = arith.constant 0 : index
      %72 = vector.load %arg6[%c0_47, %c0_48] : memref<64x32xf32, #tpu.memory_space<vmem>>, vector<64x32xf32>
      %cst_49 = arith.constant dense<0.000000e+00> : vector<64x1xf32>
      %73 = tpu.matmul %72, %69, %cst_49 {dimension_numbers = #tpu.dot_dimension_numbers<[1], [0], [0], [1], [0, 0, 1, 1], [], []>} : vector<64x32xf32>, vector<32x1xf32>, vector<64x1xf32> -> vector<64x1xf32>
      %c0_50 = arith.constant 0 : index
      %c0_51 = arith.constant 0 : index
      %74 = vector.load %arg3[%c0_50, %c0_51] : memref<64x1xf32, #tpu.memory_space<vmem>>, vector<64x1xf32>
      %75 = arith.mulf %74, %73 : vector<64x1xf32>
      %c0_52 = arith.constant 0 : index
      %c0_53 = arith.constant 0 : index
      %76 = vector.load %arg4[%c0_52, %c0_53] : memref<64x1xf32, #tpu.memory_space<vmem>>, vector<64x1xf32>
      %77 = arith.mulf %71, %75 : vector<64x1xf32>
      %78 = arith.subf %76, %77 : vector<64x1xf32>
      %c0_54 = arith.constant 0 : index
      %c0_55 = arith.constant 0 : index
      %c0_56 = arith.constant 0 : index
      %79 = vector.load %arg16[%c0_54, %c0_55, %c0_56] : memref<2x64x1xf32, #tpu.memory_space<vmem>>, vector<1x64x1xf32>
      %80 = vector.shape_cast %79 : vector<1x64x1xf32> to vector<64x1xf32>
      %81 = vector.shape_cast %75 : vector<64x1xf32> to vector<1x64x1xf32>
      tpu.vector_store %arg16[%c0_54, %c0_55, %c0_56], %81 {strides = array<i32>} : memref<2x64x1xf32, #tpu.memory_space<vmem>>, vector<1x64x1xf32>,
      %c1_57 = arith.constant 1 : index
      %c0_58 = arith.constant 0 : index
      %c0_59 = arith.constant 0 : index
      %82 = vector.load %arg16[%c1_57, %c0_58, %c0_59] : memref<2x64x1xf32, #tpu.memory_space<vmem>>, vector<1x64x1xf32>
      %83 = vector.shape_cast %82 : vector<1x64x1xf32> to vector<64x1xf32>
      %84 = vector.shape_cast %78 : vector<64x1xf32> to vector<1x64x1xf32>
      tpu.vector_store %arg16[%c1_57, %c0_58, %c0_59], %84 {strides = array<i32>} : memref<2x64x1xf32, #tpu.memory_space<vmem>>, vector<1x64x1xf32>,
      %85 = vector.broadcast %75 : vector<64x1xf32> to vector<64x256xf32>
      %86 = arith.mulf %51, %85 : vector<64x256xf32>
      %87 = vector.broadcast %78 : vector<64x1xf32> to vector<64x256xf32>
      %88 = arith.addf %86, %87 : vector<64x256xf32>
      %c0_60 = arith.constant 0 : index
      %c0_61 = arith.constant 0 : index
      %89 = vector.load %arg7[%c0_60, %c0_61] : memref<128x64xf32, #tpu.memory_space<vmem>>, vector<128x64xf32>
      %cst_62 = arith.constant dense<0.000000e+00> : vector<128x256xf32>
      %90 = tpu.matmul %89, %88, %cst_62 {dimension_numbers = #tpu.dot_dimension_numbers<[1], [0], [0], [1], [0, 0, 1, 1], [], []>} : vector<128x64xf32>, vector<64x256xf32>, vector<128x256xf32> -> vector<128x256xf32>
      %c0_63 = arith.constant 0 : index
      %c0_64 = arith.constant 0 : index
      %91 = vector.load %arg8[%c0_63, %c0_64] : memref<128x1xf32, #tpu.memory_space<vmem>>, vector<128x1xf32>
      %92 = vector.broadcast %91 : vector<128x1xf32> to vector<128x256xf32>
      %93 = arith.addf %90, %92 : vector<128x256xf32>
      %c0_65 = arith.constant 0 : index
      %c0_66 = arith.constant 0 : index
      %94 = vector.load %arg15[%c0_65, %c0_66] : memref<128x256xf32, #tpu.memory_space<vmem>>, vector<128x256xf32>
      tpu.vector_store %arg15[%c0_65, %c0_66], %93 {strides = array<i32>} : memref<128x256xf32, #tpu.memory_space<vmem>>, vector<128x256xf32>,
    } else {
    }
    %c128_i32 = arith.constant 128 : i32
    %3 = arith.muli %arg1, %c128_i32 : i32
    %4 = tpu.assume_multiple %3, 128 : i32
    %c0 = arith.constant 0 : index
    %c0_1 = arith.constant 0 : index
    %5 = arith.index_cast %4 : i32 to index
    %6 = vector.load %arg2[%c0, %c0_1, %5] : memref<1x64x256xf32, #tpu.memory_space<vmem>>, vector<1x64x128xf32>
    %7 = vector.shape_cast %6 : vector<1x64x128xf32> to vector<64x128xf32>
    %c0_2 = arith.constant 0 : index
    %c0_3 = arith.constant 0 : index
    %c0_4 = arith.constant 0 : index
    %8 = vector.load %arg16[%c0_2, %c0_3, %c0_4] : memref<2x64x1xf32, #tpu.memory_space<vmem>>, vector<1x64x1xf32>
    %9 = vector.shape_cast %8 : vector<1x64x1xf32> to vector<64x1xf32>
    %10 = vector.broadcast %9 : vector<64x1xf32> to vector<64x128xf32>
    %11 = arith.mulf %7, %10 : vector<64x128xf32>
    %c1 = arith.constant 1 : index
    %c0_5 = arith.constant 0 : index
    %c0_6 = arith.constant 0 : index
    %12 = vector.load %arg16[%c1, %c0_5, %c0_6] : memref<2x64x1xf32, #tpu.memory_space<vmem>>, vector<1x64x1xf32>
    %13 = vector.shape_cast %12 : vector<1x64x1xf32> to vector<64x1xf32>
    %14 = vector.broadcast %13 : vector<64x1xf32> to vector<64x128xf32>
    %15 = arith.addf %11, %14 : vector<64x128xf32>
    %c0_7 = arith.constant 0 : index
    %c0_8 = arith.constant 0 : index
    %16 = vector.load %arg9[%c0_7, %c0_8] : memref<64x64xf32, #tpu.memory_space<vmem>>, vector<64x64xf32>
    %cst = arith.constant dense<0.000000e+00> : vector<64x128xf32>
    %17 = tpu.matmul %16, %15, %cst {dimension_numbers = #tpu.dot_dimension_numbers<[1], [0], [0], [1], [0, 0, 1, 1], [], []>} : vector<64x64xf32>, vector<64x128xf32>, vector<64x128xf32> -> vector<64x128xf32>
    %c0_9 = arith.constant 0 : index
    %c0_10 = arith.constant 0 : index
    %18 = vector.load %arg10[%c0_9, %c0_10] : memref<64x1xf32, #tpu.memory_space<vmem>>, vector<64x1xf32>
    %19 = vector.broadcast %18 : vector<64x1xf32> to vector<64x128xf32>
    %20 = arith.addf %17, %19 : vector<64x128xf32>
    %cst_11 = arith.constant 1.250000e-01 : f32
    %21 = vector.broadcast %cst_11 : f32 to vector<64x128xf32>
    %22 = arith.mulf %20, %21 : vector<64x128xf32>
    %c0_12 = arith.constant 0 : index
    %c0_13 = arith.constant 0 : index
    %23 = vector.load %arg15[%c0_12, %c0_13] : memref<128x256xf32, #tpu.memory_space<vmem>>, vector<64x256xf32>
    %c64 = arith.constant 64 : index
    %c0_14 = arith.constant 0 : index
    %24 = vector.load %arg15[%c64, %c0_14] : memref<128x256xf32, #tpu.memory_space<vmem>>, vector<64x256xf32>
    %cst_15 = arith.constant dense<0.000000e+00> : vector<128x256xf32>
    %25 = tpu.matmul %22, %23, %cst_15 {dimension_numbers = #tpu.dot_dimension_numbers<[0], [0], [1], [1], [0, 1, 1, 1], [], []>} : vector<64x128xf32>, vector<64x256xf32>, vector<128x256xf32> -> vector<128x256xf32>
    %cst_16 = arith.constant dense<0xFF800000> : vector<128xf32>
    %26 = vector.multi_reduction <maximumf>, %25, %cst_16 [1] : vector<128x256xf32> to vector<128xf32>
    %27 = vector.shape_cast %26 : vector<128xf32> to vector<128x1xf32>
    %28 = vector.broadcast %27 : vector<128x1xf32> to vector<128x256xf32>
    %29 = arith.subf %25, %28 : vector<128x256xf32>
    %30 = math.exp %29 : vector<128x256xf32>
    %cst_17 = arith.constant dense<0.000000e+00> : vector<128xf32>
    %31 = vector.multi_reduction <add>, %30, %cst_17 [1] : vector<128x256xf32> to vector<128xf32>
    %32 = vector.shape_cast %31 : vector<128xf32> to vector<128x1xf32>
    %33 = tpu.reciprocal %32 : vector<128x1xf32> -> vector<128x1xf32>
    %34 = vector.broadcast %33 : vector<128x1xf32> to vector<128x256xf32>
    %35 = arith.mulf %30, %34 : vector<128x256xf32>
    %36 = tpu.transpose %35, [1, 0] : vector<128x256xf32> -> vector<256x128xf32>
    %c0_18 = arith.constant 0 : index
    %c0_19 = arith.constant 0 : index
    %c0_20 = arith.constant 0 : index
    %37 = vector.load %arg14[%c0_18, %c0_19, %c0_20] : memref<1x256x128xf32, #tpu.memory_space<vmem>>, vector<1x256x128xf32>
    %38 = vector.shape_cast %37 : vector<1x256x128xf32> to vector<256x128xf32>
    %39 = vector.shape_cast %36 : vector<256x128xf32> to vector<1x256x128xf32>
    tpu.vector_store %arg14[%c0_18, %c0_19, %c0_20], %39 {strides = array<i32>} : memref<1x256x128xf32, #tpu.memory_space<vmem>>, vector<1x256x128xf32>,
    %cst_21 = arith.constant dense<0.000000e+00> : vector<64x128xf32>
    %40 = tpu.matmul %24, %36, %cst_21 {dimension_numbers = #tpu.dot_dimension_numbers<[1], [0], [0], [1], [0, 0, 1, 1], [], []>} : vector<64x256xf32>, vector<256x128xf32>, vector<64x128xf32> -> vector<64x128xf32>
    %c0_22 = arith.constant 0 : index
    %c0_23 = arith.constant 0 : index
    %41 = vector.load %arg11[%c0_22, %c0_23] : memref<64x64xf32, #tpu.memory_space<vmem>>, vector<64x64xf32>
    %cst_24 = arith.constant dense<0.000000e+00> : vector<64x128xf32>
    %42 = tpu.matmul %41, %40, %cst_24 {dimension_numbers = #tpu.dot_dimension_numbers<[1], [0], [0], [1], [0, 0, 1, 1], [], []>} : vector<64x64xf32>, vector<64x128xf32>, vector<64x128xf32> -> vector<64x128xf32>
    %c0_25 = arith.constant 0 : index
    %c0_26 = arith.constant 0 : index
    %43 = vector.load %arg12[%c0_25, %c0_26] : memref<64x1xf32, #tpu.memory_space<vmem>>, vector<64x1xf32>
    %44 = vector.broadcast %43 : vector<64x1xf32> to vector<64x128xf32>
    %45 = arith.addf %42, %44 : vector<64x128xf32>
    %46 = arith.addf %7, %45 : vector<64x128xf32>
    %c0_27 = arith.constant 0 : index
    %c0_28 = arith.constant 0 : index
    %c0_29 = arith.constant 0 : index
    %47 = vector.load %arg13[%c0_27, %c0_28, %c0_29] : memref<1x64x128xf32, #tpu.memory_space<vmem>>, vector<1x64x128xf32>
    %48 = vector.shape_cast %47 : vector<1x64x128xf32> to vector<64x128xf32>
    %49 = vector.shape_cast %46 : vector<64x128xf32> to vector<1x64x128xf32>
    tpu.vector_store %arg13[%c0_27, %c0_28, %c0_29], %49 {strides = array<i32>} : memref<1x64x128xf32, #tpu.memory_space<vmem>>, vector<1x64x128xf32>,
    return
  }
  func.func @transform_0(%arg0: i32, %arg1: i32) -> (i32, i32, i32) {
    %c0_i32 = arith.constant 0 : i32
    %c0_i32_0 = arith.constant 0 : i32
    %c0_i32_1 = arith.constant 0 : i32
    return %arg0, %c0_i32, %c0_i32_0 : i32, i32, i32
  }
  func.func @transform_1(%arg0: i32, %arg1: i32) -> (i32, i32) {
    %c0_i32 = arith.constant 0 : i32
    %c0_i32_0 = arith.constant 0 : i32
    %c0_i32_1 = arith.constant 0 : i32
    return %c0_i32, %c0_i32_0 : i32, i32
  }
  func.func @transform_2(%arg0: i32, %arg1: i32) -> (i32, i32) {
    %c0_i32 = arith.constant 0 : i32
    %c0_i32_0 = arith.constant 0 : i32
    %c0_i32_1 = arith.constant 0 : i32
    return %c0_i32, %c0_i32_0 : i32, i32
  }
  func.func @transform_3(%arg0: i32, %arg1: i32) -> (i32, i32) {
    %c0_i32 = arith.constant 0 : i32
    %c0_i32_0 = arith.constant 0 : i32
    %c0_i32_1 = arith.constant 0 : i32
    return %c0_i32, %c0_i32_0 : i32, i32
  }
  func.func @transform_4(%arg0: i32, %arg1: i32) -> (i32, i32) {
    %c0_i32 = arith.constant 0 : i32
    %c0_i32_0 = arith.constant 0 : i32
    %c0_i32_1 = arith.constant 0 : i32
    return %c0_i32, %c0_i32_0 : i32, i32
  }
  func.func @transform_5(%arg0: i32, %arg1: i32) -> (i32, i32) {
    %c0_i32 = arith.constant 0 : i32
    %c0_i32_0 = arith.constant 0 : i32
    %c0_i32_1 = arith.constant 0 : i32
    return %c0_i32, %c0_i32_0 : i32, i32
  }
  func.func @transform_6(%arg0: i32, %arg1: i32) -> (i32, i32) {
    %c0_i32 = arith.constant 0 : i32
    %c0_i32_0 = arith.constant 0 : i32
    %c0_i32_1 = arith.constant 0 : i32
    return %c0_i32, %c0_i32_0 : i32, i32
  }
  func.func @transform_7(%arg0: i32, %arg1: i32) -> (i32, i32) {
    %c0_i32 = arith.constant 0 : i32
    %c0_i32_0 = arith.constant 0 : i32
    %c0_i32_1 = arith.constant 0 : i32
    return %c0_i32, %c0_i32_0 : i32, i32
  }
  func.func @transform_8(%arg0: i32, %arg1: i32) -> (i32, i32) {
    %c0_i32 = arith.constant 0 : i32
    %c0_i32_0 = arith.constant 0 : i32
    %c0_i32_1 = arith.constant 0 : i32
    return %c0_i32, %c0_i32_0 : i32, i32
  }
  func.func @transform_9(%arg0: i32, %arg1: i32) -> (i32, i32) {
    %c0_i32 = arith.constant 0 : i32
    %c0_i32_0 = arith.constant 0 : i32
    %c0_i32_1 = arith.constant 0 : i32
    return %c0_i32, %c0_i32_0 : i32, i32
  }
  func.func @transform_10(%arg0: i32, %arg1: i32) -> (i32, i32) {
    %c0_i32 = arith.constant 0 : i32
    %c0_i32_0 = arith.constant 0 : i32
    %c0_i32_1 = arith.constant 0 : i32
    return %c0_i32, %c0_i32_0 : i32, i32
  }
  func.func @transform_11(%arg0: i32, %arg1: i32) -> (i32, i32, i32) {
    %c0_i32 = arith.constant 0 : i32
    %c0_i32_0 = arith.constant 0 : i32
    return %arg0, %c0_i32, %arg1 : i32, i32, i32
  }
  func.func @transform_12(%arg0: i32, %arg1: i32) -> (i32, i32, i32) {
    %c0_i32 = arith.constant 0 : i32
    %c0_i32_0 = arith.constant 0 : i32
    return %arg0, %c0_i32, %arg1 : i32, i32, i32
  }
}

</mosaic_0001>

<llo_original>
// kernel: tpu_custom_call.1
$region0: #{tpu_custom_call.1}
  #allocation0 [shape = 'u32[]', space=smem, size = 0x4, offset = 0x4, fixed_abs, tag = 'smem constant byte address 0x4 - core index']
  #allocation1 [shape = 'u32[144,128]{1,0:T(1,128)}', space=vmem, size = 0x12000, scoped, tag = 'internal scratch']
  #allocation2 [shape = 'f32[128,256]{1,0:T(8,128)}', space=vmem, size = 0x20000, scoped, tag = 'scratch operand']
  #allocation3 [shape = 'f32[2,64,1]{2,1,0:T(8,128)}', space=vmem, size = 0x10000, scoped, tag = 'scratch operand']
  %s0 = inlined_call_operand.vmem [shape: f32[2,64,256], index: 0, kind: input, shape index: {}]
  %s1 = inlined_call_operand.vmem [shape: f32[64,1], index: 1, kind: input, shape index: {}]
  %s2 = inlined_call_operand.vmem [shape: f32[64,1], index: 2, kind: input, shape index: {}]
  %s3 = inlined_call_operand.vmem [shape: f32[32,64], index: 3, kind: input, shape index: {}]
  %s4 = inlined_call_operand.vmem [shape: f32[64,32], index: 4, kind: input, shape index: {}]
  %s5 = inlined_call_operand.vmem [shape: f32[128,64], index: 5, kind: input, shape index: {}]
  %s6 = inlined_call_operand.vmem [shape: f32[128,1], index: 6, kind: input, shape index: {}]
  %s7 = inlined_call_operand.vmem [shape: f32[64,64], index: 7, kind: input, shape index: {}]
  %s8 = inlined_call_operand.vmem [shape: f32[64,1], index: 8, kind: input, shape index: {}]
  %s9 = inlined_call_operand.vmem [shape: f32[64,64], index: 9, kind: input, shape index: {}]
  %s10 = inlined_call_operand.vmem [shape: f32[64,1], index: 10, kind: input, shape index: {}]
  %s11 = inlined_call_operand.hbm [shape: f32[2,64,256], index: 11, kind: output, shape index: {0}]
  %s12 = inlined_call_operand.hbm [shape: f32[2,256,256], index: 12, kind: output, shape index: {1}]
  %13 = xla_tuple %s11, %s12
  %s14 = sld [smem:[#allocation0]]
  $region89: #{tpu_custom_call.1} parent=0
    _
  %s16 = ssub.s32 1, %s14
  %s17 = scalar_select 0, %s16, %s14
  $region1: #{tpu_custom_call.1} parent=0
    #allocation4 [shape = 'u8[65536]{0}', space=vmem, size = 0x10000, scoped, tag = 'output window, operand 0']
    #allocation5 [shape = 's32[2]{0}', space=sflag, size = 0x8, scoped, tag = 'scoped memory for tpu_custom_call.1']
    #allocation6 [shape = 'u8[262144]{0}', space=vmem, size = 0x40000, scoped, tag = 'output window, operand 1']
    #allocation7 [shape = 's32[2]{0}', space=sflag, size = 0x8, scoped, tag = 'scoped memory for tpu_custom_call.1']
    %18 = vsyncpa [#allocation5], 0
    %s19 = scalar_lea.sflag [#allocation5], 1
    %20 = vsyncpa %s19, 0
    %21 = vsyncpa [#allocation7], 0
    %s22 = scalar_lea.sflag [#allocation7], 1
    %23 = vsyncpa %s22, 0
    loop: start=0, step=1, limit=6
    $region2: #{tpu_custom_call.1} parent=1 // loop_pre_header
      _
    $region3: #{tpu_custom_call.1} parent=1 // loop_header
      %s25 = sphi 0, %s29
      %p26 = scmp.ge.s32.totalorder %s25, 6
      %s32 = sphi 0, %s44
      %s33 = sphi 0, %s40
      %s34 = sphi 0, %s32
      %s35 = sphi 0, %s33
      %s36 = sphi 0, %s34
      %s37 = sphi 0, %s35
      %s47 = sphi 0, %s49
      %s50 = sphi 0, %s47
      %s51 = sphi 0, %s50
      %s67 = sphi 0, %s51
      %s71 = sphi 0, %s71
      %s73 = sphi 0, %s71
      %s74 = sphi 0, %s73
      %s88 = sphi 0, %s74
      %s92 = sphi 0, %s92
      %s94 = sphi 0, %s92
      %s95 = sphi 0, %s94
      %s109 = sphi 0, %s95
      %s113 = sphi 0, %s113
      %s115 = sphi 0, %s113
      %s116 = sphi 0, %s115
      %s130 = sphi 0, %s116
      %s134 = sphi 0, %s134
      %s136 = sphi 0, %s134
      %s137 = sphi 0, %s136
      %s151 = sphi 0, %s137
      %s155 = sphi 0, %s155
      %s157 = sphi 0, %s155
      %s158 = sphi 0, %s157
      %s172 = sphi 0, %s158
      %s176 = sphi 0, %s176
      %s178 = sphi 0, %s176
      %s179 = sphi 0, %s178
      %s193 = sphi 0, %s179
      %s197 = sphi 0, %s197
      %s199 = sphi 0, %s197
      %s200 = sphi 0, %s199
      %s214 = sphi 0, %s200
      %s218 = sphi 0, %s218
      %s220 = sphi 0, %s218
      %s221 = sphi 0, %s220
      %s235 = sphi 0, %s221
      %s239 = sphi 0, %s239
      %s241 = sphi 0, %s239
      %s242 = sphi 0, %s241
      %s256 = sphi 0, %s242
      %s260 = sphi 0, %s260
      %s262 = sphi 0, %s260
      %s263 = sphi 0, %s262
      %s277 = sphi 0, %s263
      %s285 = sphi 0, %s287
      %s288 = sphi 0, %s285
      %s289 = sphi 0, %s288
      %s305 = sphi 0, %s289
      %s313 = sphi 0, %s315
      %s316 = sphi 0, %s313
      %s317 = sphi 0, %s316
      %s333 = sphi 0, %s317
    $region4: #{tpu_custom_call.1} parent=1 // loop_header_branch
      %28 = sbr.rel (%p26) target = $region8
    $region5: #{tpu_custom_call.1} parent=1 // loop_body
      %s30 = ssub.s32 %s25, 1
      %s31 = ssub.s32 %s25, 2
      %s38 = sadd.s32 1, %s33
      %p39 = scmp.ge.s32.totalorder %s38, 2
      %s40 = scalar_select %p39, 0, %s38
      %s41 = sadd.s32 1, %s32
      %s42 = scalar_select %p39, %s41, %s32
      %p43 = scmp.ge.s32.totalorder %s42, 2
      %s44 = scalar_select %p43, 0, %s42
      %s45 = ssub.s32 %s32, %s44
      %p46 = scmp.eq.s32.totalorder %s45, 0
      %s48 = sadd.s32 %s47, 1
      %s49 = scalar_select %p46, %s47, %s48
      %p52 = pneg %p46
      %p53 = scmp.eq.s32.totalorder %s25, 3
      %p54 = por %p52, %p53
      %p55 = scmp.ne.s32.totalorder %s47, %s50
      %p56 = scmp.eq.s32.totalorder %s25, 0
      %p57 = por %p55, %p56
      %p58 = scmp.ne.s32.totalorder %s47, %s50
      %p59 = scmp.eq.s32.totalorder %s30, 3
      %p60 = por %p58, %p59
      %p61 = scmp.ne.s32.totalorder %s50, %s51
      %p62 = scmp.eq.s32.totalorder %s30, 0
      %p63 = por %p61, %p62
      %p64 = scmp.ne.s32.totalorder %s50, %s51
      %p65 = scmp.eq.s32.totalorder %s31, 3
      %p66 = por %p64, %p65
      %p68 = scmp.ne.s32.totalorder %s51, %s67
      %p69 = scmp.eq.s32.totalorder %s31, 0
      %p70 = por %p68, %p69
      %s72 = sadd.s32 %s71, 1
      %p75 = scmp.eq.s32.totalorder %s25, 3
      %p76 = scmp.ne.s32.totalorder %s71, %s73
      %p77 = scmp.eq.s32.totalorder %s25, 0
      %p78 = por %p76, %p77
      %p79 = scmp.ne.s32.totalorder %s71, %s73
      %p80 = scmp.eq.s32.totalorder %s30, 3
      %p81 = por %p79, %p80
      %p82 = scmp.ne.s32.totalorder %s73, %s74
      %p83 = scmp.eq.s32.totalorder %s30, 0
      %p84 = por %p82, %p83
      %p85 = scmp.ne.s32.totalorder %s73, %s74
      %p86 = scmp.eq.s32.totalorder %s31, 3
      %p87 = por %p85, %p86
      %p89 = scmp.ne.s32.totalorder %s74, %s88
      %p90 = scmp.eq.s32.totalorder %s31, 0
      %p91 = por %p89, %p90
      %s93 = sadd.s32 %s92, 1
      %p96 = scmp.eq.s32.totalorder %s25, 3
      %p97 = scmp.ne.s32.totalorder %s92, %s94
      %p98 = scmp.eq.s32.totalorder %s25, 0
      %p99 = por %p97, %p98
      %p100 = scmp.ne.s32.totalorder %s92, %s94
      %p101 = scmp.eq.s32.totalorder %s30, 3
      %p102 = por %p100, %p101
      %p103 = scmp.ne.s32.totalorder %s94, %s95
      %p104 = scmp.eq.s32.totalorder %s30, 0
      %p105 = por %p103, %p104
      %p106 = scmp.ne.s32.totalorder %s94, %s95
      %p107 = scmp.eq.s32.totalorder %s31, 3
      %p108 = por %p106, %p107
      %p110 = scmp.ne.s32.totalorder %s95, %s109
      %p111 = scmp.eq.s32.totalorder %s31, 0
      %p112 = por %p110, %p111
      %s114 = sadd.s32 %s113, 1
      %p117 = scmp.eq.s32.totalorder %s25, 3
      %p118 = scmp.ne.s32.totalorder %s113, %s115
      %p119 = scmp.eq.s32.totalorder %s25, 0
      %p120 = por %p118, %p119
      %p121 = scmp.ne.s32.totalorder %s113, %s115
      %p122 = scmp.eq.s32.totalorder %s30, 3
      %p123 = por %p121, %p122
      %p124 = scmp.ne.s32.totalorder %s115, %s116
      %p125 = scmp.eq.s32.totalorder %s30, 0
      %p126 = por %p124, %p125
      %p127 = scmp.ne.s32.totalorder %s115, %s116
      %p128 = scmp.eq.s32.totalorder %s31, 3
      %p129 = por %p127, %p128
      %p131 = scmp.ne.s32.totalorder %s116, %s130
      %p132 = scmp.eq.s32.totalorder %s31, 0
      %p133 = por %p131, %p132
      %s135 = sadd.s32 %s134, 1
      %p138 = scmp.eq.s32.totalorder %s25, 3
      %p139 = scmp.ne.s32.totalorder %s134, %s136
      %p140 = scmp.eq.s32.totalorder %s25, 0
      %p141 = por %p139, %p140
      %p142 = scmp.ne.s32.totalorder %s134, %s136
      %p143 = scmp.eq.s32.totalorder %s30, 3
      %p144 = por %p142, %p143
      %p145 = scmp.ne.s32.totalorder %s136, %s137
      %p146 = scmp.eq.s32.totalorder %s30, 0
      %p147 = por %p145, %p146
      %p148 = scmp.ne.s32.totalorder %s136, %s137
      %p149 = scmp.eq.s32.totalorder %s31, 3
      %p150 = por %p148, %p149
      %p152 = scmp.ne.s32.totalorder %s137, %s151
      %p153 = scmp.eq.s32.totalorder %s31, 0
      %p154 = por %p152, %p153
      %s156 = sadd.s32 %s155, 1
      %p159 = scmp.eq.s32.totalorder %s25, 3
      %p160 = scmp.ne.s32.totalorder %s155, %s157
      %p161 = scmp.eq.s32.totalorder %s25, 0
      %p162 = por %p160, %p161
      %p163 = scmp.ne.s32.totalorder %s155, %s157
      %p164 = scmp.eq.s32.totalorder %s30, 3
      %p165 = por %p163, %p164
      %p166 = scmp.ne.s32.totalorder %s157, %s158
      %p167 = scmp.eq.s32.totalorder %s30, 0
      %p168 = por %p166, %p167
      %p169 = scmp.ne.s32.totalorder %s157, %s158
      %p170 = scmp.eq.s32.totalorder %s31, 3
      %p171 = por %p169, %p170
      %p173 = scmp.ne.s32.totalorder %s158, %s172
      %p174 = scmp.eq.s32.totalorder %s31, 0
      %p175 = por %p173, %p174
      %s177 = sadd.s32 %s176, 1
      %p180 = scmp.eq.s32.totalorder %s25, 3
      %p181 = scmp.ne.s32.totalorder %s176, %s178
      %p182 = scmp.eq.s32.totalorder %s25, 0
      %p183 = por %p181, %p182
      %p184 = scmp.ne.s32.totalorder %s176, %s178
      %p185 = scmp.eq.s32.totalorder %s30, 3
      %p186 = por %p184, %p185
      %p187 = scmp.ne.s32.totalorder %s178, %s179
      %p188 = scmp.eq.s32.totalorder %s30, 0
      %p189 = por %p187, %p188
      %p190 = scmp.ne.s32.totalorder %s178, %s179
      %p191 = scmp.eq.s32.totalorder %s31, 3
      %p192 = por %p190, %p191
      %p194 = scmp.ne.s32.totalorder %s179, %s193
      %p195 = scmp.eq.s32.totalorder %s31, 0
      %p196 = por %p194, %p195
      %s198 = sadd.s32 %s197, 1
      %p201 = scmp.eq.s32.totalorder %s25, 3
      %p202 = scmp.ne.s32.totalorder %s197, %s199
      %p203 = scmp.eq.s32.totalorder %s25, 0
      %p204 = por %p202, %p203
      %p205 = scmp.ne.s32.totalorder %s197, %s199
      %p206 = scmp.eq.s32.totalorder %s30, 3
      %p207 = por %p205, %p206
      %p208 = scmp.ne.s32.totalorder %s199, %s200
      %p209 = scmp.eq.s32.totalorder %s30, 0
      %p210 = por %p208, %p209
      %p211 = scmp.ne.s32.totalorder %s199, %s200
      %p212 = scmp.eq.s32.totalorder %s31, 3
      %p213 = por %p211, %p212
      %p215 = scmp.ne.s32.totalorder %s200, %s214
      %p216 = scmp.eq.s32.totalorder %s31, 0
      %p217 = por %p215, %p216
      %s219 = sadd.s32 %s218, 1
      %p222 = scmp.eq.s32.totalorder %s25, 3
      %p223 = scmp.ne.s32.totalorder %s218, %s220
      %p224 = scmp.eq.s32.totalorder %s25, 0
      %p225 = por %p223, %p224
      %p226 = scmp.ne.s32.totalorder %s218, %s220
      %p227 = scmp.eq.s32.totalorder %s30, 3
      %p228 = por %p226, %p227
      %p229 = scmp.ne.s32.totalorder %s220, %s221
      %p230 = scmp.eq.s32.totalorder %s30, 0
      %p231 = por %p229, %p230
      %p232 = scmp.ne.s32.totalorder %s220, %s221
      %p233 = scmp.eq.s32.totalorder %s31, 3
      %p234 = por %p232, %p233
      %p236 = scmp.ne.s32.totalorder %s221, %s235
      %p237 = scmp.eq.s32.totalorder %s31, 0
      %p238 = por %p236, %p237
      %s240 = sadd.s32 %s239, 1
      %p243 = scmp.eq.s32.totalorder %s25, 3
      %p244 = scmp.ne.s32.totalorder %s239, %s241
      %p245 = scmp.eq.s32.totalorder %s25, 0
      %p246 = por %p244, %p245
      %p247 = scmp.ne.s32.totalorder %s239, %s241
      %p248 = scmp.eq.s32.totalorder %s30, 3
      %p249 = por %p247, %p248
      %p250 = scmp.ne.s32.totalorder %s241, %s242
      %p251 = scmp.eq.s32.totalorder %s30, 0
      %p252 = por %p250, %p251
      %p253 = scmp.ne.s32.totalorder %s241, %s242
      %p254 = scmp.eq.s32.totalorder %s31, 3
      %p255 = por %p253, %p254
      %p257 = scmp.ne.s32.totalorder %s242, %s256
      %p258 = scmp.eq.s32.totalorder %s31, 0
      %p259 = por %p257, %p258
      %s261 = sadd.s32 %s260, 1
      %p264 = scmp.eq.s32.totalorder %s25, 3
      %p265 = scmp.ne.s32.totalorder %s260, %s262
      %p266 = scmp.eq.s32.totalorder %s25, 0
      %p267 = por %p265, %p266
      %p268 = scmp.ne.s32.totalorder %s260, %s262
      %p269 = scmp.eq.s32.totalorder %s30, 3
      %p270 = por %p268, %p269
      %p271 = scmp.ne.s32.totalorder %s262, %s263
      %p272 = scmp.eq.s32.totalorder %s30, 0
      %p273 = por %p271, %p272
      %p274 = scmp.ne.s32.totalorder %s262, %s263
      %p275 = scmp.eq.s32.totalorder %s31, 3
      %p276 = por %p274, %p275
      %p278 = scmp.ne.s32.totalorder %s263, %s277
      %p279 = scmp.eq.s32.totalorder %s31, 0
      %p280 = por %p278, %p279
      %s281 = ssub.s32 %s32, %s44
      %s282 = ssub.s32 %s33, %s40
      %s283 = sor.u32 %s281, %s282
      %p284 = scmp.eq.s32.totalorder %s283, 0
      %s286 = sadd.s32 %s285, 1
      %s287 = scalar_select %p284, %s285, %s286
      %p290 = pneg %p284
      %p291 = scmp.eq.s32.totalorder %s25, 3
      %p292 = por %p290, %p291
      %p293 = scmp.ne.s32.totalorder %s285, %s288
      %p294 = scmp.eq.s32.totalorder %s25, 0
      %p295 = por %p293, %p294
      %p296 = scmp.ne.s32.totalorder %s285, %s288
      %p297 = scmp.eq.s32.totalorder %s30, 3
      %p298 = por %p296, %p297
      %p299 = scmp.ne.s32.totalorder %s288, %s289
      %p300 = scmp.eq.s32.totalorder %s30, 0
      %p301 = por %p299, %p300
      %p302 = scmp.ne.s32.totalorder %s288, %s289
      %p303 = scmp.eq.s32.totalorder %s31, 3
      %p304 = por %p302, %p303
      %p306 = scmp.ne.s32.totalorder %s289, %s305
      %p307 = scmp.eq.s32.totalorder %s31, 0
      %p308 = por %p306, %p307
      %s309 = ssub.s32 %s32, %s44
      %s310 = ssub.s32 %s33, %s40
      %s311 = sor.u32 %s309, %s310
      %p312 = scmp.eq.s32.totalorder %s311, 0
      %s314 = sadd.s32 %s313, 1
      %s315 = scalar_select %p312, %s313, %s314
      %p318 = pneg %p312
      %p319 = scmp.eq.s32.totalorder %s25, 3
      %p320 = por %p318, %p319
      %p321 = scmp.ne.s32.totalorder %s313, %s316
      %p322 = scmp.eq.s32.totalorder %s25, 0
      %p323 = por %p321, %p322
      %p324 = scmp.ne.s32.totalorder %s313, %s316
      %p325 = scmp.eq.s32.totalorder %s30, 3
      %p326 = por %p324, %p325
      %p327 = scmp.ne.s32.totalorder %s316, %s317
      %p328 = scmp.eq.s32.totalorder %s30, 0
      %p329 = por %p327, %p328
      %p330 = scmp.ne.s32.totalorder %s316, %s317
      %p331 = scmp.eq.s32.totalorder %s31, 3
      %p332 = por %p330, %p331
      %p334 = scmp.ne.s32.totalorder %s317, %s333
      %p335 = scmp.eq.s32.totalorder %s31, 0
      %p336 = por %p334, %p335
      %p337 = scmp.le.s32.totalorder 1, %s25
      %p338 = scmp.lt.s32.totalorder %s25, 5
      %p339 = pnand %p337, %p338
      %p340 = pneg %p339
      // Predicated region
      $region9: #{tpu_custom_call.1} parent=5 // pred_check
        _
      $region10: #{tpu_custom_call.1} parent=5 // pred_check_branch
        %342 = sbr.rel (%p339) target = $region12
      $region11: #{tpu_custom_call.1} parent=5 // pred_region
        %s343 = ssub.s32 %s25, 1
        // Predicated region
        $region13: #{tpu_custom_call.1} parent=11 // pred_check
          %p344 = pneg %p84
        $region14: #{tpu_custom_call.1} parent=11 // pred_check_branch
          %346 = sbr.rel (%p344) target = $region16
        $region15: #{tpu_custom_call.1} parent=11 // pred_region
          _
        $region16: #{tpu_custom_call.1} parent=11 // pred_fallthru
          _
        // Predicated region
        $region17: #{tpu_custom_call.1} parent=11 // pred_check
          %p347 = pneg %p105
        $region18: #{tpu_custom_call.1} parent=11 // pred_check_branch
          %349 = sbr.rel (%p347) target = $region20
        $region19: #{tpu_custom_call.1} parent=11 // pred_region
          _
        $region20: #{tpu_custom_call.1} parent=11 // pred_fallthru
          _
        // Predicated region
        $region21: #{tpu_custom_call.1} parent=11 // pred_check
          %p350 = pneg %p126
        $region22: #{tpu_custom_call.1} parent=11 // pred_check_branch
          %352 = sbr.rel (%p350) target = $region24
        $region23: #{tpu_custom_call.1} parent=11 // pred_region
          _
        $region24: #{tpu_custom_call.1} parent=11 // pred_fallthru
          _
        // Predicated region
        $region25: #{tpu_custom_call.1} parent=11 // pred_check
          %p353 = pneg %p147
        $region26: #{tpu_custom_call.1} parent=11 // pred_check_branch
          %355 = sbr.rel (%p353) target = $region28
        $region27: #{tpu_custom_call.1} parent=11 // pred_region
          _
        $region28: #{tpu_custom_call.1} parent=11 // pred_fallthru
          _
        // Predicated region
        $region29: #{tpu_custom_call.1} parent=11 // pred_check
          %p356 = pneg %p168
        $region30: #{tpu_custom_call.1} parent=11 // pred_check_branch
          %358 = sbr.rel (%p356) target = $region32
        $region31: #{tpu_custom_call.1} parent=11 // pred_region
          _
        $region32: #{tpu_custom_call.1} parent=11 // pred_fallthru
          _
        // Predicated region
        $region33: #{tpu_custom_call.1} parent=11 // pred_check
          %p359 = pneg %p189
        $region34: #{tpu_custom_call.1} parent=11 // pred_check_branch
          %361 = sbr.rel (%p359) target = $region36
        $region35: #{tpu_custom_call.1} parent=11 // pred_region
          _
        $region36: #{tpu_custom_call.1} parent=11 // pred_fallthru
          _
        // Predicated region
        $region37: #{tpu_custom_call.1} parent=11 // pred_check
          %p362 = pneg %p210
        $region38: #{tpu_custom_call.1} parent=11 // pred_check_branch
          %364 = sbr.rel (%p362) target = $region40
        $region39: #{tpu_custom_call.1} parent=11 // pred_region
          _
        $region40: #{tpu_custom_call.1} parent=11 // pred_fallthru
          _
        // Predicated region
        $region41: #{tpu_custom_call.1} parent=11 // pred_check
          %p365 = pneg %p231
        $region42: #{tpu_custom_call.1} parent=11 // pred_check_branch
          %367 = sbr.rel (%p365) target = $region44
        $region43: #{tpu_custom_call.1} parent=11 // pred_region
          _
        $region44: #{tpu_custom_call.1} parent=11 // pred_fallthru
          _
        // Predicated region
        $region45: #{tpu_custom_call.1} parent=11 // pred_check
          %p368 = pneg %p252
        $region46: #{tpu_custom_call.1} parent=11 // pred_check_branch
          %370 = sbr.rel (%p368) target = $region48
        $region47: #{tpu_custom_call.1} parent=11 // pred_region
          _
        $region48: #{tpu_custom_call.1} parent=11 // pred_fallthru
          _
        // Predicated region
        $region49: #{tpu_custom_call.1} parent=11 // pred_check
          %p371 = pneg %p273
        $region50: #{tpu_custom_call.1} parent=11 // pred_check_branch
          %373 = sbr.rel (%p371) target = $region52
        $region51: #{tpu_custom_call.1} parent=11 // pred_region
          _
        $region52: #{tpu_custom_call.1} parent=11 // pred_fallthru
          _
      $region12: #{tpu_custom_call.1} parent=5 // pred_fallthru
        _
      %p374 = scmp.lt.s32.totalorder %s25, 4
      // Predicated region
      $region53: #{tpu_custom_call.1} parent=5 // pred_check
        %p375 = pneg %p374
      $region54: #{tpu_custom_call.1} parent=5 // pred_check_branch
        %377 = sbr.rel (%p375) target = $region56
      $region55: #{tpu_custom_call.1} parent=5 // pred_region
        // Predicated region
        $region57: #{tpu_custom_call.1} parent=55 // pred_check
          %p378 = pneg %p57
        $region58: #{tpu_custom_call.1} parent=55 // pred_check_branch
          %380 = sbr.rel (%p378) target = $region60
        $region59: #{tpu_custom_call.1} parent=55 // pred_region
          %p381 = scmp.lt.s32.totalorder %s32, 1
          %s382 = scalar_select %p381, %s32, 1
          %s383 = smul.addr %s382, 16
          %s384 = smul.addr %s383, 8
          %s385 = scalar_lea.vmem %s0, %s384
        $region60: #{tpu_custom_call.1} parent=55 // pred_fallthru
          _
      $region56: #{tpu_custom_call.1} parent=5 // pred_fallthru
        _
      %p386 = scmp.le.s32.totalorder 1, %s25
      %p387 = scmp.lt.s32.totalorder %s25, 5
      %p388 = pnand %p386, %p387
      %p389 = pneg %p388
      // Predicated region
      $region61: #{tpu_custom_call.1} parent=5 // pred_check
        _
      $region62: #{tpu_custom_call.1} parent=5 // pred_check_branch
        %391 = sbr.rel (%p388) target = $region64
      $region63: #{tpu_custom_call.1} parent=5 // pred_region
        %s392 = ssub.s32 %s25, 1
        %p393 = scmp.lt.s32.totalorder %s34, 1
        %s394 = scalar_select %p393, %s34, 1
        %s395 = smul.addr %s394, 16
        %s396 = smul.addr %s395, 8
        %s397 = scalar_lea.vmem %s0, %s396
        %p398 = pneg %p63
        %p399 = pneg %p60
        %p400 = pneg %p84
        %p401 = pneg %p81
        %p402 = pneg %p105
        %p403 = pneg %p102
        %p404 = pneg %p126
        %p405 = pneg %p123
        %p406 = pneg %p147
        %p407 = pneg %p144
        %p408 = pneg %p168
        %p409 = pneg %p165
        %p410 = pneg %p189
        %p411 = pneg %p186
        %p412 = pneg %p210
        %p413 = pneg %p207
        %p414 = pneg %p231
        %p415 = pneg %p228
        %p416 = pneg %p252
        %p417 = pneg %p249
        %p418 = pneg %p273
        %p419 = pneg %p270
        %p420 = pneg %p301
        %p421 = pneg %p298
        %s422 = sand.u32 %s288, 1
        %s423 = scalar_lea.sflag [#allocation5], %s422
        %s424 = sand.u32 %s288, 1
        %s425 = smul.addr %s424, 64
        %s426 = scalar_lea.vmem [#allocation4], %s425
        %p427 = pneg %p329
        %p428 = pneg %p326
        %s429 = sand.u32 %s316, 1
        %s430 = scalar_lea.sflag [#allocation7], %s429
        %s431 = sand.u32 %s316, 1
        %s432 = smul.addr %s431, 256
        %s433 = scalar_lea.vmem [#allocation6], %s432
        %p434 = scmp.lt.s32.totalorder %s34, 1
        %s435 = scalar_select %p434, %s34, 1
        %s436 = smul.addr %s435, 16
        %s437 = smul.addr %s436, 8
        %s438 = scalar_lea.vmem %s0, %s437
        %p439 = scmp.eq.s32.totalorder %s35, 0
        // Predicated region
        $region65: #{tpu_custom_call.1} parent=63 // pred_check
          %p440 = pneg %p439
        $region66: #{tpu_custom_call.1} parent=63 // pred_check_branch
          %442 = sbr.rel (%p440) target = $region68
        $region67: #{tpu_custom_call.1} parent=63 // pred_region
          %v443 = vld [vmem:[%s438] sm:$0xff]
          %v444 = vld [vmem:[%s438 + $0x8] sm:$0xff]
          %v445 = vld [vmem:[%s438 + $0x10] sm:$0xff]
          %v446 = vld [vmem:[%s438 + $0x18] sm:$0xff]
          %v447 = vld [vmem:[%s438 + $0x20] sm:$0xff]
          %v448 = vld [vmem:[%s438 + $0x28] sm:$0xff]
          %v449 = vld [vmem:[%s438 + $0x30] sm:$0xff]
          %v450 = vld [vmem:[%s438 + $0x38] sm:$0xff]
          %v451 = vld [vmem:[%s438 + $0x40] sm:$0xff]
          %v452 = vld [vmem:[%s438 + $0x48] sm:$0xff]
          %v453 = vld [vmem:[%s438 + $0x50] sm:$0xff]
          %v454 = vld [vmem:[%s438 + $0x58] sm:$0xff]
          %v455 = vld [vmem:[%s438 + $0x60] sm:$0xff]
          %v456 = vld [vmem:[%s438 + $0x68] sm:$0xff]
          %v457 = vld [vmem:[%s438 + $0x70] sm:$0xff]
          %v458 = vld [vmem:[%s438 + $0x78] sm:$0xff]
          %v459 = vadd.f32 %v443, %v444
          %460 = vadd.xlane.f32.xlu0 %v459
          %v461 = vpop.xlane.xlu0 %460
          %v462 = vadd.f32 %v445, %v446
          %463 = vadd.xlane.f32.xlu0 %v462
          %v464 = vpop.xlane.xlu0 %463
          %v465 = vadd.f32 %v447, %v448
          %466 = vadd.xlane.f32.xlu0 %v465
          %v467 = vpop.xlane.xlu0 %466
          %v468 = vadd.f32 %v449, %v450
          %469 = vadd.xlane.f32.xlu0 %v468
          %v470 = vpop.xlane.xlu0 %469
          %v471 = vadd.f32 %v451, %v452
          %472 = vadd.xlane.f32.xlu0 %v471
          %v473 = vpop.xlane.xlu0 %472
          %v474 = vadd.f32 %v453, %v454
          %475 = vadd.xlane.f32.xlu0 %v474
          %v476 = vpop.xlane.xlu0 %475
          %v477 = vadd.f32 %v455, %v456
          %478 = vadd.xlane.f32.xlu0 %v477
          %v479 = vpop.xlane.xlu0 %478
          %v480 = vadd.f32 %v457, %v458
          %481 = vadd.xlane.f32.xlu0 %v480
          %v482 = vpop.xlane.xlu0 %481
          %v483 = vmul.f32 %v443, %v443
          %v484 = vmul.f32 %v444, %v444
          %v485 = vmul.f32 %v445, %v445
          %v486 = vmul.f32 %v446, %v446
          %v487 = vmul.f32 %v447, %v447
          %v488 = vmul.f32 %v448, %v448
          %v489 = vmul.f32 %v449, %v449
          %v490 = vmul.f32 %v450, %v450
          %v491 = vmul.f32 %v451, %v451
          %v492 = vmul.f32 %v452, %v452
          %v493 = vmul.f32 %v453, %v453
          %v494 = vmul.f32 %v454, %v454
          %v495 = vmul.f32 %v455, %v455
          %v496 = vmul.f32 %v456, %v456
          %v497 = vmul.f32 %v457, %v457
          %v498 = vmul.f32 %v458, %v458
          %v499 = vadd.f32 %v483, %v484
          %500 = vadd.xlane.f32.xlu0 %v499
          %v501 = vpop.xlane.xlu0 %500
          %v502 = vadd.f32 %v485, %v486
          %503 = vadd.xlane.f32.xlu0 %v502
          %v504 = vpop.xlane.xlu0 %503
          %v505 = vadd.f32 %v487, %v488
          %506 = vadd.xlane.f32.xlu0 %v505
          %v507 = vpop.xlane.xlu0 %506
          %v508 = vadd.f32 %v489, %v490
          %509 = vadd.xlane.f32.xlu0 %v508
          %v510 = vpop.xlane.xlu0 %509
          %v511 = vadd.f32 %v491, %v492
          %512 = vadd.xlane.f32.xlu0 %v511
          %v513 = vpop.xlane.xlu0 %512
          %v514 = vadd.f32 %v493, %v494
          %515 = vadd.xlane.f32.xlu0 %v514
          %v516 = vpop.xlane.xlu0 %515
          %v517 = vadd.f32 %v495, %v496
          %518 = vadd.xlane.f32.xlu0 %v517
          %v519 = vpop.xlane.xlu0 %518
          %v520 = vadd.f32 %v497, %v498
          %521 = vadd.xlane.f32.xlu0 %v520
          %v522 = vpop.xlane.xlu0 %521
          %v523 = vld [vmem:[%s3] sm:$0xff]
          %v524 = vld [vmem:[%s3 + $0x8] sm:$0xff]
          %v525 = vld [vmem:[%s3 + $0x10] sm:$0xff]
          %v526 = vld [vmem:[%s3 + $0x18] sm:$0xff]
          %vm527 = vcmask 523264
          %v529 = vsel %vm527, %v523, 0
          %v532 = vsel %vm527, %v524, 0
          %v535 = vsel %vm527, %v525, 0
          %v538 = vsel %vm527, %v526, 0
          %540 = vmatprep.subr.mxu0 0.0
          %541 = vmatpush1.msra.mxu0 %v461
          %542 = vmatprep.subr.mxu0 0.0
          %543 = vmatpush1.msra.mxu0 %v464
          %544 = vmatprep.subr.mxu0 0.0
          %545 = vmatpush1.msra.mxu0 %v467
          %546 = vmatprep.subr.mxu0 0.0
          %547 = vmatpush1.msra.mxu0 %v470
          %548 = vmatprep.subr.mxu0 0.0
          %549 = vmatpush1.msra.mxu0 %v473
          %550 = vmatprep.subr.mxu0 0.0
          %551 = vmatpush1.msra.mxu0 %v476
          %552 = vmatprep.subr.mxu0 0.0
          %553 = vmatpush1.msra.mxu0 %v479
          %554 = vmatprep.subr.mxu0 0.0
          %555 = vmatpush1.msra.mxu0 %v482
          %556 = vmatprep.subr.mxu0 0.0
          %557 = vmatpush1.msra.mxu0 0.0
          %558 = vmatprep.subr.mxu0 0.0
          %559 = vmatpush1.msra.mxu0 0.0
          %560 = vmatprep.subr.mxu0 0.0
          %561 = vmatpush1.msra.mxu0 0.0
          %562 = vmatprep.subr.mxu0 0.0
          %563 = vmatpush1.msra.mxu0 0.0
          %564 = vmatprep.subr.mxu0 0.0
          %565 = vmatpush1.msra.mxu0 0.0
          %566 = vmatprep.subr.mxu0 0.0
          %567 = vmatpush1.msra.mxu0 0.0
          %568 = vmatprep.subr.mxu0 0.0
          %569 = vmatpush1.msra.mxu0 0.0
          %570 = vmatprep.subr.mxu0 0.0
          %571 = vmatpush1.msra.mxu0 0.0
          %572 = vmatprep.subr.mxu0 0.0
          %573 = vmatpush1.msra.mxu0 0.0
          %574 = vmatprep.subr.mxu0 0.0
          %575 = vmatpush1.msra.mxu0 0.0
          %576 = vmatprep.subr.mxu0 0.0
          %577 = vmatpush1.msra.mxu0 0.0
          %578 = vmatprep.subr.mxu0 0.0
          %579 = vmatpush1.msra.mxu0 0.0
          %580 = vmatprep.subr.mxu0 0.0
          %581 = vmatpush1.msra.mxu0 0.0
          %582 = vmatprep.subr.mxu0 0.0
          %583 = vmatpush1.msra.mxu0 0.0
          %584 = vmatprep.subr.mxu0 0.0
          %585 = vmatpush1.msra.mxu0 0.0
          %586 = vmatprep.subr.mxu0 0.0
          %587 = vmatpush1.msra.mxu0 0.0
          %588 = vmatprep.subr.mxu0 0.0
          %589 = vmatpush1.msra.mxu0 0.0
          %590 = vmatprep.subr.mxu0 0.0
          %591 = vmatpush1.msra.mxu0 0.0
          %592 = vmatprep.subr.mxu0 0.0
          %593 = vmatpush1.msra.mxu0 0.0
          %594 = vmatprep.subr.mxu0 0.0
          %595 = vmatpush1.msra.mxu0 0.0
          %596 = vmatprep.subr.mxu0 0.0
          %597 = vmatpush1.msra.mxu0 0.0
          %598 = vmatprep.subr.mxu0 0.0
          %599 = vmatpush1.msra.mxu0 0.0
          %600 = vmatprep.subr.mxu0 0.0
          %601 = vmatpush1.msra.mxu0 0.0
          %602 = vmatprep.subr.mxu0 0.0
          %603 = vmatpush1.msra.mxu0 0.0
          %604 = vmatprep.mubr.f32.mxu0 0.0
          %605 = vmatmul.mubr.f32.gmra.mrb[0].mxu0 %v529
          %v606 = vpop.f32.mrb[0].mxu0
          %v607 = vadd.f32 0.0, %v606
          %v608 = vpop.f32.mrb[0].mxu0
          %609 = vmatprep.mubr.f32.mxu0 0.0
          %610 = vmatmul.mubr.f32.gmra.mrb[0].mxu0 %v532
          %v611 = vpop.f32.mrb[0].mxu0
          %v612 = vadd.f32 0.0, %v611
          %v613 = vpop.f32.mrb[0].mxu0
          %614 = vmatprep.mubr.f32.mxu0 0.0
          %615 = vmatmul.mubr.f32.gmra.mrb[0].mxu0 %v535
          %v616 = vpop.f32.mrb[0].mxu0
          %v617 = vadd.f32 0.0, %v616
          %v618 = vpop.f32.mrb[0].mxu0
          %619 = vmatprep.mubr.f32.mxu0 0.0
          %620 = vmatmul.mubr.f32.gmra.mrb[0].mxu0 %v538
          %v621 = vpop.f32.mrb[0].mxu0
          %v622 = vadd.f32 0.0, %v621
          %v623 = vpop.f32.mrb[0].mxu0
          %624 = vdwg.mxu0
          %v625 = vmul.f32 %v607, 0.001953125
          %v626 = vmul.f32 %v612, 0.001953125
          %v627 = vmul.f32 %v617, 0.001953125
          %v628 = vmul.f32 %v622, 0.001953125
          %629 = vmatprep.subr.mxu0 0.0
          %630 = vmatpush1.msra.mxu0 %v501
          %631 = vmatprep.subr.mxu0 0.0
          %632 = vmatpush1.msra.mxu0 %v504
          %633 = vmatprep.subr.mxu0 0.0
          %634 = vmatpush1.msra.mxu0 %v507
          %635 = vmatprep.subr.mxu0 0.0
          %636 = vmatpush1.msra.mxu0 %v510
          %637 = vmatprep.subr.mxu0 0.0
          %638 = vmatpush1.msra.mxu0 %v513
          %639 = vmatprep.subr.mxu0 0.0
          %640 = vmatpush1.msra.mxu0 %v516
          %641 = vmatprep.subr.mxu0 0.0
          %642 = vmatpush1.msra.mxu0 %v519
          %643 = vmatprep.subr.mxu0 0.0
          %644 = vmatpush1.msra.mxu0 %v522
          %645 = vmatprep.subr.mxu0 0.0
          %646 = vmatpush1.msra.mxu0 0.0
          %647 = vmatprep.subr.mxu0 0.0
          %648 = vmatpush1.msra.mxu0 0.0
          %649 = vmatprep.subr.mxu0 0.0
          %650 = vmatpush1.msra.mxu0 0.0
          %651 = vmatprep.subr.mxu0 0.0
          %652 = vmatpush1.msra.mxu0 0.0
          %653 = vmatprep.subr.mxu0 0.0
          %654 = vmatpush1.msra.mxu0 0.0
          %655 = vmatprep.subr.mxu0 0.0
          %656 = vmatpush1.msra.mxu0 0.0
          %657 = vmatprep.subr.mxu0 0.0
          %658 = vmatpush1.msra.mxu0 0.0
          %659 = vmatprep.subr.mxu0 0.0
          %660 = vmatpush1.msra.mxu0 0.0
          %661 = vmatprep.subr.mxu0 0.0
          %662 = vmatpush1.msra.mxu0 0.0
          %663 = vmatprep.subr.mxu0 0.0
          %664 = vmatpush1.msra.mxu0 0.0
          %665 = vmatprep.subr.mxu0 0.0
          %666 = vmatpush1.msra.mxu0 0.0
          %667 = vmatprep.subr.mxu0 0.0
          %668 = vmatpush1.msra.mxu0 0.0
          %669 = vmatprep.subr.mxu0 0.0
          %670 = vmatpush1.msra.mxu0 0.0
          %671 = vmatprep.subr.mxu0 0.0
          %672 = vmatpush1.msra.mxu0 0.0
          %673 = vmatprep.subr.mxu0 0.0
          %674 = vmatpush1.msra.mxu0 0.0
          %675 = vmatprep.subr.mxu0 0.0
          %676 = vmatpush1.msra.mxu0 0.0
          %677 = vmatprep.subr.mxu0 0.0
          %678 = vmatpush1.msra.mxu0 0.0
          %679 = vmatprep.subr.mxu0 0.0
          %680 = vmatpush1.msra.mxu0 0.0
          %681 = vmatprep.subr.mxu0 0.0
          %682 = vmatpush1.msra.mxu0 0.0
          %683 = vmatprep.subr.mxu0 0.0
          %684 = vmatpush1.msra.mxu0 0.0
          %685 = vmatprep.subr.mxu0 0.0
          %686 = vmatpush1.msra.mxu0 0.0
          %687 = vmatprep.subr.mxu0 0.0
          %688 = vmatpush1.msra.mxu0 0.0
          %689 = vmatprep.subr.mxu0 0.0
          %690 = vmatpush1.msra.mxu0 0.0
          %691 = vmatprep.subr.mxu0 0.0
          %692 = vmatpush1.msra.mxu0 0.0
          %693 = vmatprep.mubr.f32.mxu0 0.0
          %694 = vmatmul.mubr.f32.gmra.mrb[0].mxu0 %v529
          %v695 = vpop.f32.mrb[0].mxu0
          %v696 = vadd.f32 0.0, %v695
          %v697 = vpop.f32.mrb[0].mxu0
          %698 = vmatprep.mubr.f32.mxu0 0.0
          %699 = vmatmul.mubr.f32.gmra.mrb[0].mxu0 %v532
          %v700 = vpop.f32.mrb[0].mxu0
          %v701 = vadd.f32 0.0, %v700
          %v702 = vpop.f32.mrb[0].mxu0
          %703 = vmatprep.mubr.f32.mxu0 0.0
          %704 = vmatmul.mubr.f32.gmra.mrb[0].mxu0 %v535
          %v705 = vpop.f32.mrb[0].mxu0
          %v706 = vadd.f32 0.0, %v705
          %v707 = vpop.f32.mrb[0].mxu0
          %708 = vmatprep.mubr.f32.mxu0 0.0
          %709 = vmatmul.mubr.f32.gmra.mrb[0].mxu0 %v538
          %v710 = vpop.f32.mrb[0].mxu0
          %v711 = vadd.f32 0.0, %v710
          %v712 = vpop.f32.mrb[0].mxu0
          %713 = vdwg.mxu0
          %v714 = vmul.f32 %v696, 0.001953125
          %v715 = vmul.f32 %v701, 0.001953125
          %v716 = vmul.f32 %v706, 0.001953125
          %v717 = vmul.f32 %v711, 0.001953125
          %v718 = vmul.f32 %v625, %v625
          %v719 = vmul.f32 %v626, %v626
          %v720 = vmul.f32 %v627, %v627
          %v721 = vmul.f32 %v628, %v628
          %v722 = vsub.f32 %v714, %v718
          %v723 = vsub.f32 %v715, %v719
          %v724 = vsub.f32 %v716, %v720
          %v725 = vsub.f32 %v717, %v721
          %v726 = vadd.f32 %v722, 1e-06
          %v727 = vadd.f32 %v723, 1e-06
          %v728 = vadd.f32 %v724, 1e-06
          %v729 = vadd.f32 %v725, 1e-06
          %v730 = vrsqrt.pop %v726
          %v731 = vrsqrt.pop %v727
          %v732 = vrsqrt.pop %v728
          %v733 = vrsqrt.pop %v729
          %v734 = vld [vmem:[%s4] sm:$0xff]
          %v735 = vld [vmem:[%s4 + $0x8] sm:$0xff]
          %v736 = vld [vmem:[%s4 + $0x10] sm:$0xff]
          %v737 = vld [vmem:[%s4 + $0x18] sm:$0xff]
          %v738 = vld [vmem:[%s4 + $0x20] sm:$0xff]
          %v739 = vld [vmem:[%s4 + $0x28] sm:$0xff]
          %v740 = vld [vmem:[%s4 + $0x30] sm:$0xff]
          %v741 = vld [vmem:[%s4 + $0x38] sm:$0xff]
          %vm742 = vcmask 261120
          %v744 = vsel %vm742, %v734, 0
          %v747 = vsel %vm742, %v735, 0
          %v750 = vsel %vm742, %v736, 0
          %v753 = vsel %vm742, %v737, 0
          %v756 = vsel %vm742, %v738, 0
          %v759 = vsel %vm742, %v739, 0
          %v762 = vsel %vm742, %v740, 0
          %v765 = vsel %vm742, %v741, 0
          %767 = vmatprep.subr.mxu0 0.0
          %768 = vmatpush1.msra.mxu0 %v625
          %769 = vmatprep.subr.mxu0 0.0
          %770 = vmatpush1.msra.mxu0 %v626
          %771 = vmatprep.subr.mxu0 0.0
          %772 = vmatpush1.msra.mxu0 %v627
          %773 = vmatprep.subr.mxu0 0.0
          %774 = vmatpush1.msra.mxu0 %v628
          %775 = vmatprep.subr.mxu0 0.0
          %776 = vmatpush1.msra.mxu0 0.0
          %777 = vmatprep.subr.mxu0 0.0
          %778 = vmatpush1.msra.mxu0 0.0
          %779 = vmatprep.subr.mxu0 0.0
          %780 = vmatpush1.msra.mxu0 0.0
          %781 = vmatprep.subr.mxu0 0.0
          %782 = vmatpush1.msra.mxu0 0.0
          %783 = vmatprep.subr.mxu0 0.0
          %784 = vmatpush1.msra.mxu0 0.0
          %785 = vmatprep.subr.mxu0 0.0
          %786 = vmatpush1.msra.mxu0 0.0
          %787 = vmatprep.subr.mxu0 0.0
          %788 = vmatpush1.msra.mxu0 0.0
          %789 = vmatprep.subr.mxu0 0.0
          %790 = vmatpush1.msra.mxu0 0.0
          %791 = vmatprep.subr.mxu0 0.0
          %792 = vmatpush1.msra.mxu0 0.0
          %793 = vmatprep.subr.mxu0 0.0
          %794 = vmatpush1.msra.mxu0 0.0
          %795 = vmatprep.subr.mxu0 0.0
          %796 = vmatpush1.msra.mxu0 0.0
          %797 = vmatprep.subr.mxu0 0.0
          %798 = vmatpush1.msra.mxu0 0.0
          %799 = vmatprep.subr.mxu0 0.0
          %800 = vmatpush1.msra.mxu0 0.0
          %801 = vmatprep.subr.mxu0 0.0
          %802 = vmatpush1.msra.mxu0 0.0
          %803 = vmatprep.subr.mxu0 0.0
          %804 = vmatpush1.msra.mxu0 0.0
          %805 = vmatprep.subr.mxu0 0.0
          %806 = vmatpush1.msra.mxu0 0.0
          %807 = vmatprep.subr.mxu0 0.0
          %808 = vmatpush1.msra.mxu0 0.0
          %809 = vmatprep.subr.mxu0 0.0
          %810 = vmatpush1.msra.mxu0 0.0
          %811 = vmatprep.subr.mxu0 0.0
          %812 = vmatpush1.msra.mxu0 0.0
          %813 = vmatprep.subr.mxu0 0.0
          %814 = vmatpush1.msra.mxu0 0.0
          %815 = vmatprep.subr.mxu0 0.0
          %816 = vmatpush1.msra.mxu0 0.0
          %817 = vmatprep.subr.mxu0 0.0
          %818 = vmatpush1.msra.mxu0 0.0
          %819 = vmatprep.subr.mxu0 0.0
          %820 = vmatpush1.msra.mxu0 0.0
          %821 = vmatprep.subr.mxu0 0.0
          %822 = vmatpush1.msra.mxu0 0.0
          %823 = vmatprep.subr.mxu0 0.0
          %824 = vmatpush1.msra.mxu0 0.0
          %825 = vmatprep.subr.mxu0 0.0
          %826 = vmatpush1.msra.mxu0 0.0
          %827 = vmatprep.subr.mxu0 0.0
          %828 = vmatpush1.msra.mxu0 0.0
          %829 = vmatprep.subr.mxu0 0.0
          %830 = vmatpush1.msra.mxu0 0.0
          %831 = vmatprep.mubr.f32.mxu0 0.0
          %832 = vmatmul.mubr.f32.gmra.mrb[0].mxu0 %v744
          %v833 = vpop.f32.mrb[0].mxu0
          %v834 = vadd.f32 0.0, %v833
          %v835 = vpop.f32.mrb[0].mxu0
          %836 = vmatprep.mubr.f32.mxu0 0.0
          %837 = vmatmul.mubr.f32.gmra.mrb[0].mxu0 %v747
          %v838 = vpop.f32.mrb[0].mxu0
          %v839 = vadd.f32 0.0, %v838
          %v840 = vpop.f32.mrb[0].mxu0
          %841 = vmatprep.mubr.f32.mxu0 0.0
          %842 = vmatmul.mubr.f32.gmra.mrb[0].mxu0 %v750
          %v843 = vpop.f32.mrb[0].mxu0
          %v844 = vadd.f32 0.0, %v843
          %v845 = vpop.f32.mrb[0].mxu0
          %846 = vmatprep.mubr.f32.mxu0 0.0
          %847 = vmatmul.mubr.f32.gmra.mrb[0].mxu0 %v753
          %v848 = vpop.f32.mrb[0].mxu0
          %v849 = vadd.f32 0.0, %v848
          %v850 = vpop.f32.mrb[0].mxu0
          %851 = vmatprep.mubr.f32.mxu0 0.0
          %852 = vmatmul.mubr.f32.gmra.mrb[0].mxu0 %v756
          %v853 = vpop.f32.mrb[0].mxu0
          %v854 = vadd.f32 0.0, %v853
          %v855 = vpop.f32.mrb[0].mxu0
          %856 = vmatprep.mubr.f32.mxu0 0.0
          %857 = vmatmul.mubr.f32.gmra.mrb[0].mxu0 %v759
          %v858 = vpop.f32.mrb[0].mxu0
          %v859 = vadd.f32 0.0, %v858
          %v860 = vpop.f32.mrb[0].mxu0
          %861 = vmatprep.mubr.f32.mxu0 0.0
          %862 = vmatmul.mubr.f32.gmra.mrb[0].mxu0 %v762
          %v863 = vpop.f32.mrb[0].mxu0
          %v864 = vadd.f32 0.0, %v863
          %v865 = vpop.f32.mrb[0].mxu0
          %866 = vmatprep.mubr.f32.mxu0 0.0
          %867 = vmatmul.mubr.f32.gmra.mrb[0].mxu0 %v765
          %v868 = vpop.f32.mrb[0].mxu0
          %v869 = vadd.f32 0.0, %v868
          %v870 = vpop.f32.mrb[0].mxu0
          %871 = vdwg.mxu0
          %872 = vmatprep.subr.mxu0 0.0
          %873 = vmatpush1.msra.mxu0 %v730
          %874 = vmatprep.subr.mxu0 0.0
          %875 = vmatpush1.msra.mxu0 %v731
          %876 = vmatprep.subr.mxu0 0.0
          %877 = vmatpush1.msra.mxu0 %v732
          %878 = vmatprep.subr.mxu0 0.0
          %879 = vmatpush1.msra.mxu0 %v733
          %880 = vmatprep.subr.mxu0 0.0
          %881 = vmatpush1.msra.mxu0 0.0
          %882 = vmatprep.subr.mxu0 0.0
          %883 = vmatpush1.msra.mxu0 0.0
          %884 = vmatprep.subr.mxu0 0.0
          %885 = vmatpush1.msra.mxu0 0.0
          %886 = vmatprep.subr.mxu0 0.0
          %887 = vmatpush1.msra.mxu0 0.0
          %888 = vmatprep.subr.mxu0 0.0
          %889 = vmatpush1.msra.mxu0 0.0
          %890 = vmatprep.subr.mxu0 0.0
          %891 = vmatpush1.msra.mxu0 0.0
          %892 = vmatprep.subr.mxu0 0.0
          %893 = vmatpush1.msra.mxu0 0.0
          %894 = vmatprep.subr.mxu0 0.0
          %895 = vmatpush1.msra.mxu0 0.0
          %896 = vmatprep.subr.mxu0 0.0
          %897 = vmatpush1.msra.mxu0 0.0
          %898 = vmatprep.subr.mxu0 0.0
          %899 = vmatpush1.msra.mxu0 0.0
          %900 = vmatprep.subr.mxu0 0.0
          %901 = vmatpush1.msra.mxu0 0.0
          %902 = vmatprep.subr.mxu0 0.0
          %903 = vmatpush1.msra.mxu0 0.0
          %904 = vmatprep.subr.mxu0 0.0
          %905 = vmatpush1.msra.mxu0 0.0
          %906 = vmatprep.subr.mxu0 0.0
          %907 = vmatpush1.msra.mxu0 0.0
          %908 = vmatprep.subr.mxu0 0.0
          %909 = vmatpush1.msra.mxu0 0.0
          %910 = vmatprep.subr.mxu0 0.0
          %911 = vmatpush1.msra.mxu0 0.0
          %912 = vmatprep.subr.mxu0 0.0
          %913 = vmatpush1.msra.mxu0 0.0
          %914 = vmatprep.subr.mxu0 0.0
          %915 = vmatpush1.msra.mxu0 0.0
          %916 = vmatprep.subr.mxu0 0.0
          %917 = vmatpush1.msra.mxu0 0.0
          %918 = vmatprep.subr.mxu0 0.0
          %919 = vmatpush1.msra.mxu0 0.0
          %920 = vmatprep.subr.mxu0 0.0
          %921 = vmatpush1.msra.mxu0 0.0
          %922 = vmatprep.subr.mxu0 0.0
          %923 = vmatpush1.msra.mxu0 0.0
          %924 = vmatprep.subr.mxu0 0.0
          %925 = vmatpush1.msra.mxu0 0.0
          %926 = vmatprep.subr.mxu0 0.0
          %927 = vmatpush1.msra.mxu0 0.0
          %928 = vmatprep.subr.mxu0 0.0
          %929 = vmatpush1.msra.mxu0 0.0
          %930 = vmatprep.subr.mxu0 0.0
          %931 = vmatpush1.msra.mxu0 0.0
          %932 = vmatprep.subr.mxu0 0.0
          %933 = vmatpush1.msra.mxu0 0.0
          %934 = vmatprep.subr.mxu0 0.0
          %935 = vmatpush1.msra.mxu0 0.0
          %936 = vmatprep.mubr.f32.mxu0 0.0
          %937 = vmatmul.mubr.f32.gmra.mrb[0].mxu0 %v744
          %v938 = vpop.f32.mrb[0].mxu0
          %v939 = vadd.f32 0.0, %v938
          %v940 = vpop.f32.mrb[0].mxu0
          %941 = vmatprep.mubr.f32.mxu0 0.0
          %942 = vmatmul.mubr.f32.gmra.mrb[0].mxu0 %v747
          %v943 = vpop.f32.mrb[0].mxu0
          %v944 = vadd.f32 0.0, %v943
          %v945 = vpop.f32.mrb[0].mxu0
          %946 = vmatprep.mubr.f32.mxu0 0.0
          %947 = vmatmul.mubr.f32.gmra.mrb[0].mxu0 %v750
          %v948 = vpop.f32.mrb[0].mxu0
          %v949 = vadd.f32 0.0, %v948
          %v950 = vpop.f32.mrb[0].mxu0
          %951 = vmatprep.mubr.f32.mxu0 0.0
          %952 = vmatmul.mubr.f32.gmra.mrb[0].mxu0 %v753
          %v953 = vpop.f32.mrb[0].mxu0
          %v954 = vadd.f32 0.0, %v953
          %v955 = vpop.f32.mrb[0].mxu0
          %956 = vmatprep.mubr.f32.mxu0 0.0
          %957 = vmatmul.mubr.f32.gmra.mrb[0].mxu0 %v756
          %v958 = vpop.f32.mrb[0].mxu0
          %v959 = vadd.f32 0.0, %v958
          %v960 = vpop.f32.mrb[0].mxu0
          %961 = vmatprep.mubr.f32.mxu0 0.0
          %962 = vmatmul.mubr.f32.gmra.mrb[0].mxu0 %v759
          %v963 = vpop.f32.mrb[0].mxu0
          %v964 = vadd.f32 0.0, %v963
          %v965 = vpop.f32.mrb[0].mxu0
          %966 = vmatprep.mubr.f32.mxu0 0.0
          %967 = vmatmul.mubr.f32.gmra.mrb[0].mxu0 %v762
          %v968 = vpop.f32.mrb[0].mxu0
          %v969 = vadd.f32 0.0, %v968
          %v970 = vpop.f32.mrb[0].mxu0
          %971 = vmatprep.mubr.f32.mxu0 0.0
          %972 = vmatmul.mubr.f32.gmra.mrb[0].mxu0 %v765
          %v973 = vpop.f32.mrb[0].mxu0
          %v974 = vadd.f32 0.0, %v973
          %v975 = vpop.f32.mrb[0].mxu0
          %976 = vdwg.mxu0
          %v977 = vld [vmem:[%s1] sm:$0xff]
          %v978 = vld [vmem:[%s1 + $0x8] sm:$0xff]
          %v979 = vld [vmem:[%s1 + $0x10] sm:$0xff]
          %v980 = vld [vmem:[%s1 + $0x18] sm:$0xff]
          %v981 = vld [vmem:[%s1 + $0x20] sm:$0xff]
          %v982 = vld [vmem:[%s1 + $0x28] sm:$0xff]
          %v983 = vld [vmem:[%s1 + $0x30] sm:$0xff]
          %v984 = vld [vmem:[%s1 + $0x38] sm:$0xff]
          %v985 = vmul.f32 %v977, %v939
          %v986 = vmul.f32 %v978, %v944
          %v987 = vmul.f32 %v979, %v949
          %v988 = vmul.f32 %v980, %v954
          %v989 = vmul.f32 %v981, %v959
          %v990 = vmul.f32 %v982, %v964
          %v991 = vmul.f32 %v983, %v969
          %v992 = vmul.f32 %v984, %v974
          %v993 = vld [vmem:[%s2] sm:$0xff]
          %v994 = vld [vmem:[%s2 + $0x8] sm:$0xff]
          %v995 = vld [vmem:[%s2 + $0x10] sm:$0xff]
          %v996 = vld [vmem:[%s2 + $0x18] sm:$0xff]
          %v997 = vld [vmem:[%s2 + $0x20] sm:$0xff]
          %v998 = vld [vmem:[%s2 + $0x28] sm:$0xff]
          %v999 = vld [vmem:[%s2 + $0x30] sm:$0xff]
          %v1000 = vld [vmem:[%s2 + $0x38] sm:$0xff]
          %v1001 = vmul.f32 %v834, %v985
          %v1002 = vmul.f32 %v839, %v986
          %v1003 = vmul.f32 %v844, %v987
          %v1004 = vmul.f32 %v849, %v988
          %v1005 = vmul.f32 %v854, %v989
          %v1006 = vmul.f32 %v859, %v990
          %v1007 = vmul.f32 %v864, %v991
          %v1008 = vmul.f32 %v869, %v992
          %v1009 = vsub.f32 %v993, %v1001
          %v1010 = vsub.f32 %v994, %v1002
          %v1011 = vsub.f32 %v995, %v1003
          %v1012 = vsub.f32 %v996, %v1004
          %v1013 = vsub.f32 %v997, %v1005
          %v1014 = vsub.f32 %v998, %v1006
          %v1015 = vsub.f32 %v999, %v1007
          %v1016 = vsub.f32 %v1000, %v1008
          %vm1017 = vcmask 7168
          %1018 = vst.msk [vmem:[#allocation3] sm:$0xff] %vm1017, %v985
          %1019 = vst.msk [vmem:[#allocation3 + $0x8] sm:$0xff] %vm1017, %v986
          %1020 = vst.msk [vmem:[#allocation3 + $0x10] sm:$0xff] %vm1017, %v987
          %1021 = vst.msk [vmem:[#allocation3 + $0x18] sm:$0xff] %vm1017, %v988
          %1022 = vst.msk [vmem:[#allocation3 + $0x20] sm:$0xff] %vm1017, %v989
          %1023 = vst.msk [vmem:[#allocation3 + $0x28] sm:$0xff] %vm1017, %v990
          %1024 = vst.msk [vmem:[#allocation3 + $0x30] sm:$0xff] %vm1017, %v991
          %1025 = vst.msk [vmem:[#allocation3 + $0x38] sm:$0xff] %vm1017, %v992
          %s1026 = scalar_lea.vmem [#allocation3], 64
          %1027 = vst.msk [vmem:[%s1026] sm:$0xff] %vm1017, %v1009
          %1028 = vst.msk [vmem:[%s1026 + $0x8] sm:$0xff] %vm1017, %v1010
          %1029 = vst.msk [vmem:[%s1026 + $0x10] sm:$0xff] %vm1017, %v1011
          %1030 = vst.msk [vmem:[%s1026 + $0x18] sm:$0xff] %vm1017, %v1012
          %1031 = vst.msk [vmem:[%s1026 + $0x20] sm:$0xff] %vm1017, %v1013
          %1032 = vst.msk [vmem:[%s1026 + $0x28] sm:$0xff] %vm1017, %v1014
          %1033 = vst.msk [vmem:[%s1026 + $0x30] sm:$0xff] %vm1017, %v1015
          %1034 = vst.msk [vmem:[%s1026 + $0x38] sm:$0xff] %vm1017, %v1016
          %1036 = vset.pattern.permute.xlu0 0
          %1037 = vperm.xlu0 %1036, %v985
          %v1038 = vpop.permute.xlu0 %1037
          %1041 = vset.pattern.permute.xlu0 0
          %1042 = vperm.xlu0 %1041, %v986
          %v1043 = vpop.permute.xlu0 %1042
          %1046 = vset.pattern.permute.xlu0 0
          %1047 = vperm.xlu0 %1046, %v987
          %v1048 = vpop.permute.xlu0 %1047
          %1051 = vset.pattern.permute.xlu0 0
          %1052 = vperm.xlu0 %1051, %v988
          %v1053 = vpop.permute.xlu0 %1052
          %1056 = vset.pattern.permute.xlu0 0
          %1057 = vperm.xlu0 %1056, %v989
          %v1058 = vpop.permute.xlu0 %1057
          %1061 = vset.pattern.permute.xlu0 0
          %1062 = vperm.xlu0 %1061, %v990
          %v1063 = vpop.permute.xlu0 %1062
          %1066 = vset.pattern.permute.xlu0 0
          %1067 = vperm.xlu0 %1066, %v991
          %v1068 = vpop.permute.xlu0 %1067
          %1071 = vset.pattern.permute.xlu0 0
          %1072 = vperm.xlu0 %1071, %v992
          %v1073 = vpop.permute.xlu0 %1072
          %v1075 = vmul.f32 %v443, %v1038
          %v1076 = vmul.f32 %v444, %v1038
          %v1077 = vmul.f32 %v445, %v1043
          %v1078 = vmul.f32 %v446, %v1043
          %v1079 = vmul.f32 %v447, %v1048
          %v1080 = vmul.f32 %v448, %v1048
          %v1081 = vmul.f32 %v449, %v1053
          %v1082 = vmul.f32 %v450, %v1053
          %v1083 = vmul.f32 %v451, %v1058
          %v1084 = vmul.f32 %v452, %v1058
          %v1085 = vmul.f32 %v453, %v1063
          %v1086 = vmul.f32 %v454, %v1063
          %v1087 = vmul.f32 %v455, %v1068
          %v1088 = vmul.f32 %v456, %v1068
          %v1089 = vmul.f32 %v457, %v1073
          %v1090 = vmul.f32 %v458, %v1073
          %1092 = vset.pattern.permute.xlu0 0
          %1093 = vperm.xlu0 %1092, %v1009
          %v1094 = vpop.permute.xlu0 %1093
          %1097 = vset.pattern.permute.xlu0 0
          %1098 = vperm.xlu0 %1097, %v1010
          %v1099 = vpop.permute.xlu0 %1098
          %1102 = vset.pattern.permute.xlu0 0
          %1103 = vperm.xlu0 %1102, %v1011
          %v1104 = vpop.permute.xlu0 %1103
          %1107 = vset.pattern.permute.xlu0 0
          %1108 = vperm.xlu0 %1107, %v1012
          %v1109 = vpop.permute.xlu0 %1108
          %1112 = vset.pattern.permute.xlu0 0
          %1113 = vperm.xlu0 %1112, %v1013
          %v1114 = vpop.permute.xlu0 %1113
          %1117 = vset.pattern.permute.xlu0 0
          %1118 = vperm.xlu0 %1117, %v1014
          %v1119 = vpop.permute.xlu0 %1118
          %1122 = vset.pattern.permute.xlu0 0
          %1123 = vperm.xlu0 %1122, %v1015
          %v1124 = vpop.permute.xlu0 %1123
          %1127 = vset.pattern.permute.xlu0 0
          %1128 = vperm.xlu0 %1127, %v1016
          %v1129 = vpop.permute.xlu0 %1128
          %v1131 = vadd.f32 %v1075, %v1094
          %v1132 = vadd.f32 %v1076, %v1094
          %v1133 = vadd.f32 %v1077, %v1099
          %v1134 = vadd.f32 %v1078, %v1099
          %v1135 = vadd.f32 %v1079, %v1104
          %v1136 = vadd.f32 %v1080, %v1104
          %v1137 = vadd.f32 %v1081, %v1109
          %v1138 = vadd.f32 %v1082, %v1109
          %v1139 = vadd.f32 %v1083, %v1114
          %v1140 = vadd.f32 %v1084, %v1114
          %v1141 = vadd.f32 %v1085, %v1119
          %v1142 = vadd.f32 %v1086, %v1119
          %v1143 = vadd.f32 %v1087, %v1124
          %v1144 = vadd.f32 %v1088, %v1124
          %v1145 = vadd.f32 %v1089, %v1129
          %v1146 = vadd.f32 %v1090, %v1129
          %v1147 = vld [vmem:[%s5] sm:$0xff]
          %v1148 = vld [vmem:[%s5 + $0x8] sm:$0xff]
          %v1149 = vld [vmem:[%s5 + $0x10] sm:$0xff]
          %v1150 = vld [vmem:[%s5 + $0x18] sm:$0xff]
          %v1151 = vld [vmem:[%s5 + $0x20] sm:$0xff]
          %v1152 = vld [vmem:[%s5 + $0x28] sm:$0xff]
          %v1153 = vld [vmem:[%s5 + $0x30] sm:$0xff]
          %v1154 = vld [vmem:[%s5 + $0x38] sm:$0xff]
          %v1155 = vld [vmem:[%s5 + $0x40] sm:$0xff]
          %v1156 = vld [vmem:[%s5 + $0x48] sm:$0xff]
          %v1157 = vld [vmem:[%s5 + $0x50] sm:$0xff]
          %v1158 = vld [vmem:[%s5 + $0x58] sm:$0xff]
          %v1159 = vld [vmem:[%s5 + $0x60] sm:$0xff]
          %v1160 = vld [vmem:[%s5 + $0x68] sm:$0xff]
          %v1161 = vld [vmem:[%s5 + $0x70] sm:$0xff]
          %v1162 = vld [vmem:[%s5 + $0x78] sm:$0xff]
          %v1163 = vld [vmem:[%s6] sm:$0xff]
          %v1164 = vld [vmem:[%s6 + $0x8] sm:$0xff]
          %v1165 = vld [vmem:[%s6 + $0x10] sm:$0xff]
          %v1166 = vld [vmem:[%s6 + $0x18] sm:$0xff]
          %v1167 = vld [vmem:[%s6 + $0x20] sm:$0xff]
          %v1168 = vld [vmem:[%s6 + $0x28] sm:$0xff]
          %v1169 = vld [vmem:[%s6 + $0x30] sm:$0xff]
          %v1170 = vld [vmem:[%s6 + $0x38] sm:$0xff]
          %v1171 = vld [vmem:[%s6 + $0x40] sm:$0xff]
          %v1172 = vld [vmem:[%s6 + $0x48] sm:$0xff]
          %v1173 = vld [vmem:[%s6 + $0x50] sm:$0xff]
          %v1174 = vld [vmem:[%s6 + $0x58] sm:$0xff]
          %v1175 = vld [vmem:[%s6 + $0x60] sm:$0xff]
          %v1176 = vld [vmem:[%s6 + $0x68] sm:$0xff]
          %v1177 = vld [vmem:[%s6 + $0x70] sm:$0xff]
          %v1178 = vld [vmem:[%s6 + $0x78] sm:$0xff]
          %1180 = vset.pattern.permute.xlu0 0
          %1181 = vperm.xlu0 %1180, %v1163
          %v1182 = vpop.permute.xlu0 %1181
          %1185 = vset.pattern.permute.xlu0 0
          %1186 = vperm.xlu0 %1185, %v1164
          %v1187 = vpop.permute.xlu0 %1186
          %1190 = vset.pattern.permute.xlu0 0
          %1191 = vperm.xlu0 %1190, %v1165
          %v1192 = vpop.permute.xlu0 %1191
          %1195 = vset.pattern.permute.xlu0 0
          %1196 = vperm.xlu0 %1195, %v1166
          %v1197 = vpop.permute.xlu0 %1196
          %1200 = vset.pattern.permute.xlu0 0
          %1201 = vperm.xlu0 %1200, %v1167
          %v1202 = vpop.permute.xlu0 %1201
          %1205 = vset.pattern.permute.xlu0 0
          %1206 = vperm.xlu0 %1205, %v1168
          %v1207 = vpop.permute.xlu0 %1206
          %1210 = vset.pattern.permute.xlu0 0
          %1211 = vperm.xlu0 %1210, %v1169
          %v1212 = vpop.permute.xlu0 %1211
          %1215 = vset.pattern.permute.xlu0 0
          %1216 = vperm.xlu0 %1215, %v1170
          %v1217 = vpop.permute.xlu0 %1216
          %1220 = vset.pattern.permute.xlu0 0
          %1221 = vperm.xlu0 %1220, %v1171
          %v1222 = vpop.permute.xlu0 %1221
          %1225 = vset.pattern.permute.xlu0 0
          %1226 = vperm.xlu0 %1225, %v1172
          %v1227 = vpop.permute.xlu0 %1226
          %1230 = vset.pattern.permute.xlu0 0
          %1231 = vperm.xlu0 %1230, %v1173
          %v1232 = vpop.permute.xlu0 %1231
          %1235 = vset.pattern.permute.xlu0 0
          %1236 = vperm.xlu0 %1235, %v1174
          %v1237 = vpop.permute.xlu0 %1236
          %1240 = vset.pattern.permute.xlu0 0
          %1241 = vperm.xlu0 %1240, %v1175
          %v1242 = vpop.permute.xlu0 %1241
          %1245 = vset.pattern.permute.xlu0 0
          %1246 = vperm.xlu0 %1245, %v1176
          %v1247 = vpop.permute.xlu0 %1246
          %1250 = vset.pattern.permute.xlu0 0
          %1251 = vperm.xlu0 %1250, %v1177
          %v1252 = vpop.permute.xlu0 %1251
          %1255 = vset.pattern.permute.xlu0 0
          %1256 = vperm.xlu0 %1255, %v1178
          %v1257 = vpop.permute.xlu0 %1256
          %v1260 = vsel %vm527, %v1147, 0
          %v1263 = vsel %vm527, %v1148, 0
          %v1266 = vsel %vm527, %v1149, 0
          %v1269 = vsel %vm527, %v1150, 0
          %v1272 = vsel %vm527, %v1151, 0
          %v1275 = vsel %vm527, %v1152, 0
          %v1278 = vsel %vm527, %v1153, 0
          %v1281 = vsel %vm527, %v1154, 0
          %v1284 = vsel %vm527, %v1155, 0
          %v1287 = vsel %vm527, %v1156, 0
          %v1290 = vsel %vm527, %v1157, 0
          %v1293 = vsel %vm527, %v1158, 0
          %v1296 = vsel %vm527, %v1159, 0
          %v1299 = vsel %vm527, %v1160, 0
          %v1302 = vsel %vm527, %v1161, 0
          %v1305 = vsel %vm527, %v1162, 0
          %1307 = vmatprep.subr.mxu0 %v1132
          %1308 = vmatpush1.msra.mxu0 %v1131
          %1309 = vmatprep.subr.mxu0 %v1134
          %1310 = vmatpush1.msra.mxu0 %v1133
          %1311 = vmatprep.subr.mxu0 %v1136
          %1312 = vmatpush1.msra.mxu0 %v1135
          %1313 = vmatprep.subr.mxu0 %v1138
          %1314 = vmatpush1.msra.mxu0 %v1137
          %1315 = vmatprep.subr.mxu0 %v1140
          %1316 = vmatpush1.msra.mxu0 %v1139
          %1317 = vmatprep.subr.mxu0 %v1142
          %1318 = vmatpush1.msra.mxu0 %v1141
          %1319 = vmatprep.subr.mxu0 %v1144
          %1320 = vmatpush1.msra.mxu0 %v1143
          %1321 = vmatprep.subr.mxu0 %v1146
          %1322 = vmatpush1.msra.mxu0 %v1145
          %1323 = vmatprep.subr.mxu0 0.0
          %1324 = vmatpush1.msra.mxu0 0.0
          %1325 = vmatprep.subr.mxu0 0.0
          %1326 = vmatpush1.msra.mxu0 0.0
          %1327 = vmatprep.subr.mxu0 0.0
          %1328 = vmatpush1.msra.mxu0 0.0
          %1329 = vmatprep.subr.mxu0 0.0
          %1330 = vmatpush1.msra.mxu0 0.0
          %1331 = vmatprep.subr.mxu0 0.0
          %1332 = vmatpush1.msra.mxu0 0.0
          %1333 = vmatprep.subr.mxu0 0.0
          %1334 = vmatpush1.msra.mxu0 0.0
          %1335 = vmatprep.subr.mxu0 0.0
          %1336 = vmatpush1.msra.mxu0 0.0
          %1337 = vmatprep.subr.mxu0 0.0
          %1338 = vmatpush1.msra.mxu0 0.0
          %1339 = vmatprep.subr.mxu0 0.0
          %1340 = vmatpush1.msra.mxu0 0.0
          %1341 = vmatprep.subr.mxu0 0.0
          %1342 = vmatpush1.msra.mxu0 0.0
          %1343 = vmatprep.subr.mxu0 0.0
          %1344 = vmatpush1.msra.mxu0 0.0
          %1345 = vmatprep.subr.mxu0 0.0
          %1346 = vmatpush1.msra.mxu0 0.0
          %1347 = vmatprep.subr.mxu0 0.0
          %1348 = vmatpush1.msra.mxu0 0.0
          %1349 = vmatprep.subr.mxu0 0.0
          %1350 = vmatpush1.msra.mxu0 0.0
          %1351 = vmatprep.subr.mxu0 0.0
          %1352 = vmatpush1.msra.mxu0 0.0
          %1353 = vmatprep.subr.mxu0 0.0
          %1354 = vmatpush1.msra.mxu0 0.0
          %1355 = vmatprep.subr.mxu0 0.0
          %1356 = vmatpush1.msra.mxu0 0.0
          %1357 = vmatprep.subr.mxu0 0.0
          %1358 = vmatpush1.msra.mxu0 0.0
          %1359 = vmatprep.subr.mxu0 0.0
          %1360 = vmatpush1.msra.mxu0 0.0
          %1361 = vmatprep.subr.mxu0 0.0
          %1362 = vmatpush1.msra.mxu0 0.0
          %1363 = vmatprep.subr.mxu0 0.0
          %1364 = vmatpush1.msra.mxu0 0.0
          %1365 = vmatprep.subr.mxu0 0.0
          %1366 = vmatpush1.msra.mxu0 0.0
          %1367 = vmatprep.subr.mxu0 0.0
          %1368 = vmatpush1.msra.mxu0 0.0
          %1369 = vmatprep.subr.mxu0 0.0
          %1370 = vmatpush1.msra.mxu0 0.0
          %1371 = vmatprep.mubr.f32.mxu0 0.0
          %1372 = vmatmul.mubr.f32.gmra.mrb[0].mxu0 %v1260
          %v1373 = vpop.f32.mrb[0].mxu0
          %v1374 = vadd.f32 %v1182, %v1373
          %v1375 = vpop.f32.mrb[0].mxu0
          %v1376 = vadd.f32 %v1182, %v1375
          %1377 = vmatprep.mubr.f32.mxu0 0.0
          %1378 = vmatmul.mubr.f32.gmra.mrb[0].mxu0 %v1263
          %v1379 = vpop.f32.mrb[0].mxu0
          %v1380 = vadd.f32 %v1187, %v1379
          %v1381 = vpop.f32.mrb[0].mxu0
          %v1382 = vadd.f32 %v1187, %v1381
          %1383 = vmatprep.mubr.f32.mxu0 0.0
          %1384 = vmatmul.mubr.f32.gmra.mrb[0].mxu0 %v1266
          %v1385 = vpop.f32.mrb[0].mxu0
          %v1386 = vadd.f32 %v1192, %v1385
          %v1387 = vpop.f32.mrb[0].mxu0
          %v1388 = vadd.f32 %v1192, %v1387
          %1389 = vmatprep.mubr.f32.mxu0 0.0
          %1390 = vmatmul.mubr.f32.gmra.mrb[0].mxu0 %v1269
          %v1391 = vpop.f32.mrb[0].mxu0
          %v1392 = vadd.f32 %v1197, %v1391
          %v1393 = vpop.f32.mrb[0].mxu0
          %v1394 = vadd.f32 %v1197, %v1393
          %1395 = vmatprep.mubr.f32.mxu0 0.0
          %1396 = vmatmul.mubr.f32.gmra.mrb[0].mxu0 %v1272
          %v1397 = vpop.f32.mrb[0].mxu0
          %v1398 = vadd.f32 %v1202, %v1397
          %v1399 = vpop.f32.mrb[0].mxu0
          %v1400 = vadd.f32 %v1202, %v1399
          %1401 = vmatprep.mubr.f32.mxu0 0.0
          %1402 = vmatmul.mubr.f32.gmra.mrb[0].mxu0 %v1275
          %v1403 = vpop.f32.mrb[0].mxu0
          %v1404 = vadd.f32 %v1207, %v1403
          %v1405 = vpop.f32.mrb[0].mxu0
          %v1406 = vadd.f32 %v1207, %v1405
          %1407 = vmatprep.mubr.f32.mxu0 0.0
          %1408 = vmatmul.mubr.f32.gmra.mrb[0].mxu0 %v1278
          %v1409 = vpop.f32.mrb[0].mxu0
          %v1410 = vadd.f32 %v1212, %v1409
          %v1411 = vpop.f32.mrb[0].mxu0
          %v1412 = vadd.f32 %v1212, %v1411
          %1413 = vmatprep.mubr.f32.mxu0 0.0
          %1414 = vmatmul.mubr.f32.gmra.mrb[0].mxu0 %v1281
          %v1415 = vpop.f32.mrb[0].mxu0
          %v1416 = vadd.f32 %v1217, %v1415
          %v1417 = vpop.f32.mrb[0].mxu0
          %v1418 = vadd.f32 %v1217, %v1417
          %1419 = vmatprep.mubr.f32.mxu0 0.0
          %1420 = vmatmul.mubr.f32.gmra.mrb[0].mxu0 %v1284
          %v1421 = vpop.f32.mrb[0].mxu0
          %v1422 = vadd.f32 %v1222, %v1421
          %v1423 = vpop.f32.mrb[0].mxu0
          %v1424 = vadd.f32 %v1222, %v1423
          %1425 = vmatprep.mubr.f32.mxu0 0.0
          %1426 = vmatmul.mubr.f32.gmra.mrb[0].mxu0 %v1287
          %v1427 = vpop.f32.mrb[0].mxu0
          %v1428 = vadd.f32 %v1227, %v1427
          %v1429 = vpop.f32.mrb[0].mxu0
          %v1430 = vadd.f32 %v1227, %v1429
          %1431 = vmatprep.mubr.f32.mxu0 0.0
          %1432 = vmatmul.mubr.f32.gmra.mrb[0].mxu0 %v1290
          %v1433 = vpop.f32.mrb[0].mxu0
          %v1434 = vadd.f32 %v1232, %v1433
          %v1435 = vpop.f32.mrb[0].mxu0
          %v1436 = vadd.f32 %v1232, %v1435
          %1437 = vmatprep.mubr.f32.mxu0 0.0
          %1438 = vmatmul.mubr.f32.gmra.mrb[0].mxu0 %v1293
          %v1439 = vpop.f32.mrb[0].mxu0
          %v1440 = vadd.f32 %v1237, %v1439
          %v1441 = vpop.f32.mrb[0].mxu0
          %v1442 = vadd.f32 %v1237, %v1441
          %1443 = vmatprep.mubr.f32.mxu0 0.0
          %1444 = vmatmul.mubr.f32.gmra.mrb[0].mxu0 %v1296
          %v1445 = vpop.f32.mrb[0].mxu0
          %v1446 = vadd.f32 %v1242, %v1445
          %v1447 = vpop.f32.mrb[0].mxu0
          %v1448 = vadd.f32 %v1242, %v1447
          %1449 = vmatprep.mubr.f32.mxu0 0.0
          %1450 = vmatmul.mubr.f32.gmra.mrb[0].mxu0 %v1299
          %v1451 = vpop.f32.mrb[0].mxu0
          %v1452 = vadd.f32 %v1247, %v1451
          %v1453 = vpop.f32.mrb[0].mxu0
          %v1454 = vadd.f32 %v1247, %v1453
          %1455 = vmatprep.mubr.f32.mxu0 0.0
          %1456 = vmatmul.mubr.f32.gmra.mrb[0].mxu0 %v1302
          %v1457 = vpop.f32.mrb[0].mxu0
          %v1458 = vadd.f32 %v1252, %v1457
          %v1459 = vpop.f32.mrb[0].mxu0
          %v1460 = vadd.f32 %v1252, %v1459
          %1461 = vmatprep.mubr.f32.mxu0 0.0
          %1462 = vmatmul.mubr.f32.gmra.mrb[0].mxu0 %v1305
          %v1463 = vpop.f32.mrb[0].mxu0
          %v1464 = vadd.f32 %v1257, %v1463
          %v1465 = vpop.f32.mrb[0].mxu0
          %v1466 = vadd.f32 %v1257, %v1465
          %1467 = vdwg.mxu0
          %1468 = vst [vmem:[#allocation2] sm:$0xff] %v1374
          %1469 = vst [vmem:[#allocation2 + $0x8] sm:$0xff] %v1376
          %1470 = vst [vmem:[#allocation2 + $0x10] sm:$0xff] %v1380
          %1471 = vst [vmem:[#allocation2 + $0x18] sm:$0xff] %v1382
          %1472 = vst [vmem:[#allocation2 + $0x20] sm:$0xff] %v1386
          %1473 = vst [vmem:[#allocation2 + $0x28] sm:$0xff] %v1388
          %1474 = vst [vmem:[#allocation2 + $0x30] sm:$0xff] %v1392
          %1475 = vst [vmem:[#allocation2 + $0x38] sm:$0xff] %v1394
          %1476 = vst [vmem:[#allocation2 + $0x40] sm:$0xff] %v1398
          %1477 = vst [vmem:[#allocation2 + $0x48] sm:$0xff] %v1400
          %1478 = vst [vmem:[#allocation2 + $0x50] sm:$0xff] %v1404
          %1479 = vst [vmem:[#allocation2 + $0x58] sm:$0xff] %v1406
          %1480 = vst [vmem:[#allocation2 + $0x60] sm:$0xff] %v1410
          %1481 = vst [vmem:[#allocation2 + $0x68] sm:$0xff] %v1412
          %1482 = vst [vmem:[#allocation2 + $0x70] sm:$0xff] %v1416
          %1483 = vst [vmem:[#allocation2 + $0x78] sm:$0xff] %v1418
          %1484 = vst [vmem:[#allocation2 + $0x80] sm:$0xff] %v1422
          %1485 = vst [vmem:[#allocation2 + $0x88] sm:$0xff] %v1424
          %1486 = vst [vmem:[#allocation2 + $0x90] sm:$0xff] %v1428
          %1487 = vst [vmem:[#allocation2 + $0x98] sm:$0xff] %v1430
          %1488 = vst [vmem:[#allocation2 + $0xa0] sm:$0xff] %v1434
          %1489 = vst [vmem:[#allocation2 + $0xa8] sm:$0xff] %v1436
          %1490 = vst [vmem:[#allocation2 + $0xb0] sm:$0xff] %v1440
          %1491 = vst [vmem:[#allocation2 + $0xb8] sm:$0xff] %v1442
          %1492 = vst [vmem:[#allocation2 + $0xc0] sm:$0xff] %v1446
          %1493 = vst [vmem:[#allocation2 + $0xc8] sm:$0xff] %v1448
          %1494 = vst [vmem:[#allocation2 + $0xd0] sm:$0xff] %v1452
          %1495 = vst [vmem:[#allocation2 + $0xd8] sm:$0xff] %v1454
          %1496 = vst [vmem:[#allocation2 + $0xe0] sm:$0xff] %v1458
          %1497 = vst [vmem:[#allocation2 + $0xe8] sm:$0xff] %v1460
          %1498 = vst [vmem:[#allocation2 + $0xf0] sm:$0xff] %v1464
          %1499 = vst [vmem:[#allocation2 + $0xf8] sm:$0xff] %v1466
        $region68: #{tpu_custom_call.1} parent=63 // pred_fallthru
          _
        %s1500 = smul.u32 %s35, 128
        %s1501 = sshra.s32 %s1500, 7
        %s1502 = sand.u32 %s1500, 127
        %s1503 = smul.addr %s1501, 8
        %s1504 = scalar_lea.vmem %s438, %s1503
        %v1505 = vld [vmem:[%s1504] sm:$0xff]
        %v1506 = vld [vmem:[%s1504 + $0x10] sm:$0xff]
        %v1507 = vld [vmem:[%s1504 + $0x20] sm:$0xff]
        %v1508 = vld [vmem:[%s1504 + $0x30] sm:$0xff]
        %v1509 = vld [vmem:[%s1504 + $0x40] sm:$0xff]
        %v1510 = vld [vmem:[%s1504 + $0x50] sm:$0xff]
        %v1511 = vld [vmem:[%s1504 + $0x60] sm:$0xff]
        %v1512 = vld [vmem:[%s1504 + $0x70] sm:$0xff]
        %v1513 = vld [vmem:[#allocation3] sm:$0xff]
        %v1514 = vld [vmem:[#allocation3 + $0x8] sm:$0xff]
        %v1515 = vld [vmem:[#allocation3 + $0x10] sm:$0xff]
        %v1516 = vld [vmem:[#allocation3 + $0x18] sm:$0xff]
        %v1517 = vld [vmem:[#allocation3 + $0x20] sm:$0xff]
        %v1518 = vld [vmem:[#allocation3 + $0x28] sm:$0xff]
        %v1519 = vld [vmem:[#allocation3 + $0x30] sm:$0xff]
        %v1520 = vld [vmem:[#allocation3 + $0x38] sm:$0xff]
        %1522 = vset.pattern.permute.xlu0 0
        %1523 = vperm.xlu0 %1522, %v1513
        %v1524 = vpop.permute.xlu0 %1523
        %1527 = vset.pattern.permute.xlu0 0
        %1528 = vperm.xlu0 %1527, %v1514
        %v1529 = vpop.permute.xlu0 %1528
        %1532 = vset.pattern.permute.xlu0 0
        %1533 = vperm.xlu0 %1532, %v1515
        %v1534 = vpop.permute.xlu0 %1533
        %1537 = vset.pattern.permute.xlu0 0
        %1538 = vperm.xlu0 %1537, %v1516
        %v1539 = vpop.permute.xlu0 %1538
        %1542 = vset.pattern.permute.xlu0 0
        %1543 = vperm.xlu0 %1542, %v1517
        %v1544 = vpop.permute.xlu0 %1543
        %1547 = vset.pattern.permute.xlu0 0
        %1548 = vperm.xlu0 %1547, %v1518
        %v1549 = vpop.permute.xlu0 %1548
        %1552 = vset.pattern.permute.xlu0 0
        %1553 = vperm.xlu0 %1552, %v1519
        %v1554 = vpop.permute.xlu0 %1553
        %1557 = vset.pattern.permute.xlu0 0
        %1558 = vperm.xlu0 %1557, %v1520
        %v1559 = vpop.permute.xlu0 %1558
        %v1561 = vmul.f32 %v1505, %v1524
        %v1562 = vmul.f32 %v1506, %v1529
        %v1563 = vmul.f32 %v1507, %v1534
        %v1564 = vmul.f32 %v1508, %v1539
        %v1565 = vmul.f32 %v1509, %v1544
        %v1566 = vmul.f32 %v1510, %v1549
        %v1567 = vmul.f32 %v1511, %v1554
        %v1568 = vmul.f32 %v1512, %v1559
        %s1569 = scalar_lea.vmem [#allocation3], 64
        %v1570 = vld [vmem:[%s1569] sm:$0xff]
        %v1571 = vld [vmem:[%s1569 + $0x8] sm:$0xff]
        %v1572 = vld [vmem:[%s1569 + $0x10] sm:$0xff]
        %v1573 = vld [vmem:[%s1569 + $0x18] sm:$0xff]
        %v1574 = vld [vmem:[%s1569 + $0x20] sm:$0xff]
        %v1575 = vld [vmem:[%s1569 + $0x28] sm:$0xff]
        %v1576 = vld [vmem:[%s1569 + $0x30] sm:$0xff]
        %v1577 = vld [vmem:[%s1569 + $0x38] sm:$0xff]
        %1579 = vset.pattern.permute.xlu0 0
        %1580 = vperm.xlu0 %1579, %v1570
        %v1581 = vpop.permute.xlu0 %1580
        %1584 = vset.pattern.permute.xlu0 0
        %1585 = vperm.xlu0 %1584, %v1571
        %v1586 = vpop.permute.xlu0 %1585
        %1589 = vset.pattern.permute.xlu0 0
        %1590 = vperm.xlu0 %1589, %v1572
        %v1591 = vpop.permute.xlu0 %1590
        %1594 = vset.pattern.permute.xlu0 0
        %1595 = vperm.xlu0 %1594, %v1573
        %v1596 = vpop.permute.xlu0 %1595
        %1599 = vset.pattern.permute.xlu0 0
        %1600 = vperm.xlu0 %1599, %v1574
        %v1601 = vpop.permute.xlu0 %1600
        %1604 = vset.pattern.permute.xlu0 0
        %1605 = vperm.xlu0 %1604, %v1575
        %v1606 = vpop.permute.xlu0 %1605
        %1609 = vset.pattern.permute.xlu0 0
        %1610 = vperm.xlu0 %1609, %v1576
        %v1611 = vpop.permute.xlu0 %1610
        %1614 = vset.pattern.permute.xlu0 0
        %1615 = vperm.xlu0 %1614, %v1577
        %v1616 = vpop.permute.xlu0 %1615
        %v1618 = vadd.f32 %v1561, %v1581
        %v1619 = vadd.f32 %v1562, %v1586
        %v1620 = vadd.f32 %v1563, %v1591
        %v1621 = vadd.f32 %v1564, %v1596
        %v1622 = vadd.f32 %v1565, %v1601
        %v1623 = vadd.f32 %v1566, %v1606
        %v1624 = vadd.f32 %v1567, %v1611
        %v1625 = vadd.f32 %v1568, %v1616
        %v1626 = vld [vmem:[%s7] sm:$0xff]
        %v1627 = vld [vmem:[%s7 + $0x8] sm:$0xff]
        %v1628 = vld [vmem:[%s7 + $0x10] sm:$0xff]
        %v1629 = vld [vmem:[%s7 + $0x18] sm:$0xff]
        %v1630 = vld [vmem:[%s7 + $0x20] sm:$0xff]
        %v1631 = vld [vmem:[%s7 + $0x28] sm:$0xff]
        %v1632 = vld [vmem:[%s7 + $0x30] sm:$0xff]
        %v1633 = vld [vmem:[%s7 + $0x38] sm:$0xff]
        %v1634 = vld [vmem:[%s8] sm:$0xff]
        %v1635 = vld [vmem:[%s8 + $0x8] sm:$0xff]
        %v1636 = vld [vmem:[%s8 + $0x10] sm:$0xff]
        %v1637 = vld [vmem:[%s8 + $0x18] sm:$0xff]
        %v1638 = vld [vmem:[%s8 + $0x20] sm:$0xff]
        %v1639 = vld [vmem:[%s8 + $0x28] sm:$0xff]
        %v1640 = vld [vmem:[%s8 + $0x30] sm:$0xff]
        %v1641 = vld [vmem:[%s8 + $0x38] sm:$0xff]
        %1643 = vset.pattern.permute.xlu0 0
        %1644 = vperm.xlu0 %1643, %v1634
        %v1645 = vpop.permute.xlu0 %1644
        %1648 = vset.pattern.permute.xlu0 0
        %1649 = vperm.xlu0 %1648, %v1635
        %v1650 = vpop.permute.xlu0 %1649
        %1653 = vset.pattern.permute.xlu0 0
        %1654 = vperm.xlu0 %1653, %v1636
        %v1655 = vpop.permute.xlu0 %1654
        %1658 = vset.pattern.permute.xlu0 0
        %1659 = vperm.xlu0 %1658, %v1637
        %v1660 = vpop.permute.xlu0 %1659
        %1663 = vset.pattern.permute.xlu0 0
        %1664 = vperm.xlu0 %1663, %v1638
        %v1665 = vpop.permute.xlu0 %1664
        %1668 = vset.pattern.permute.xlu0 0
        %1669 = vperm.xlu0 %1668, %v1639
        %v1670 = vpop.permute.xlu0 %1669
        %1673 = vset.pattern.permute.xlu0 0
        %1674 = vperm.xlu0 %1673, %v1640
        %v1675 = vpop.permute.xlu0 %1674
        %1678 = vset.pattern.permute.xlu0 0
        %1679 = vperm.xlu0 %1678, %v1641
        %v1680 = vpop.permute.xlu0 %1679
        %vm1682 = vcmask 523264
        %v1684 = vsel %vm1682, %v1626, 0
        %v1687 = vsel %vm1682, %v1627, 0
        %v1690 = vsel %vm1682, %v1628, 0
        %v1693 = vsel %vm1682, %v1629, 0
        %v1696 = vsel %vm1682, %v1630, 0
        %v1699 = vsel %vm1682, %v1631, 0
        %v1702 = vsel %vm1682, %v1632, 0
        %v1705 = vsel %vm1682, %v1633, 0
        %1707 = vmatprep.subr.mxu0 0.0
        %1708 = vmatpush1.msra.mxu0 %v1618
        %1709 = vmatprep.subr.mxu0 0.0
        %1710 = vmatpush1.msra.mxu0 %v1619
        %1711 = vmatprep.subr.mxu0 0.0
        %1712 = vmatpush1.msra.mxu0 %v1620
        %1713 = vmatprep.subr.mxu0 0.0
        %1714 = vmatpush1.msra.mxu0 %v1621
        %1715 = vmatprep.subr.mxu0 0.0
        %1716 = vmatpush1.msra.mxu0 %v1622
        %1717 = vmatprep.subr.mxu0 0.0
        %1718 = vmatpush1.msra.mxu0 %v1623
        %1719 = vmatprep.subr.mxu0 0.0
        %1720 = vmatpush1.msra.mxu0 %v1624
        %1721 = vmatprep.subr.mxu0 0.0
        %1722 = vmatpush1.msra.mxu0 %v1625
        %1723 = vmatprep.subr.mxu0 0.0
        %1724 = vmatpush1.msra.mxu0 0.0
        %1725 = vmatprep.subr.mxu0 0.0
        %1726 = vmatpush1.msra.mxu0 0.0
        %1727 = vmatprep.subr.mxu0 0.0
        %1728 = vmatpush1.msra.mxu0 0.0
        %1729 = vmatprep.subr.mxu0 0.0
        %1730 = vmatpush1.msra.mxu0 0.0
        %1731 = vmatprep.subr.mxu0 0.0
        %1732 = vmatpush1.msra.mxu0 0.0
        %1733 = vmatprep.subr.mxu0 0.0
        %1734 = vmatpush1.msra.mxu0 0.0
        %1735 = vmatprep.subr.mxu0 0.0
        %1736 = vmatpush1.msra.mxu0 0.0
        %1737 = vmatprep.subr.mxu0 0.0
        %1738 = vmatpush1.msra.mxu0 0.0
        %1739 = vmatprep.subr.mxu0 0.0
        %1740 = vmatpush1.msra.mxu0 0.0
        %1741 = vmatprep.subr.mxu0 0.0
        %1742 = vmatpush1.msra.mxu0 0.0
        %1743 = vmatprep.subr.mxu0 0.0
        %1744 = vmatpush1.msra.mxu0 0.0
        %1745 = vmatprep.subr.mxu0 0.0
        %1746 = vmatpush1.msra.mxu0 0.0
        %1747 = vmatprep.subr.mxu0 0.0
        %1748 = vmatpush1.msra.mxu0 0.0
        %1749 = vmatprep.subr.mxu0 0.0
        %1750 = vmatpush1.msra.mxu0 0.0
        %1751 = vmatprep.subr.mxu0 0.0
        %1752 = vmatpush1.msra.mxu0 0.0
        %1753 = vmatprep.subr.mxu0 0.0
        %1754 = vmatpush1.msra.mxu0 0.0
        %1755 = vmatprep.subr.mxu0 0.0
        %1756 = vmatpush1.msra.mxu0 0.0
        %1757 = vmatprep.subr.mxu0 0.0
        %1758 = vmatpush1.msra.mxu0 0.0
        %1759 = vmatprep.subr.mxu0 0.0
        %1760 = vmatpush1.msra.mxu0 0.0
        %1761 = vmatprep.subr.mxu0 0.0
        %1762 = vmatpush1.msra.mxu0 0.0
        %1763 = vmatprep.subr.mxu0 0.0
        %1764 = vmatpush1.msra.mxu0 0.0
        %1765 = vmatprep.subr.mxu0 0.0
        %1766 = vmatpush1.msra.mxu0 0.0
        %1767 = vmatprep.subr.mxu0 0.0
        %1768 = vmatpush1.msra.mxu0 0.0
        %1769 = vmatprep.subr.mxu0 0.0
        %1770 = vmatpush1.msra.mxu0 0.0
        %1771 = vmatprep.mubr.f32.mxu0 0.0
        %1772 = vmatmul.mubr.f32.gmra.mrb[0].mxu0 %v1684
        %v1773 = vpop.f32.mrb[0].mxu0
        %v1774 = vadd.f32 %v1645, %v1773
        %v1775 = vpop.f32.mrb[0].mxu0
        %1776 = vmatprep.mubr.f32.mxu0 0.0
        %1777 = vmatmul.mubr.f32.gmra.mrb[0].mxu0 %v1687
        %v1778 = vpop.f32.mrb[0].mxu0
        %v1779 = vadd.f32 %v1650, %v1778
        %v1780 = vpop.f32.mrb[0].mxu0
        %1781 = vmatprep.mubr.f32.mxu0 0.0
        %1782 = vmatmul.mubr.f32.gmra.mrb[0].mxu0 %v1690
        %v1783 = vpop.f32.mrb[0].mxu0
        %v1784 = vadd.f32 %v1655, %v1783
        %v1785 = vpop.f32.mrb[0].mxu0
        %1786 = vmatprep.mubr.f32.mxu0 0.0
        %1787 = vmatmul.mubr.f32.gmra.mrb[0].mxu0 %v1693
        %v1788 = vpop.f32.mrb[0].mxu0
        %v1789 = vadd.f32 %v1660, %v1788
        %v1790 = vpop.f32.mrb[0].mxu0
        %1791 = vmatprep.mubr.f32.mxu0 0.0
        %1792 = vmatmul.mubr.f32.gmra.mrb[0].mxu0 %v1696
        %v1793 = vpop.f32.mrb[0].mxu0
        %v1794 = vadd.f32 %v1665, %v1793
        %v1795 = vpop.f32.mrb[0].mxu0
        %1796 = vmatprep.mubr.f32.mxu0 0.0
        %1797 = vmatmul.mubr.f32.gmra.mrb[0].mxu0 %v1699
        %v1798 = vpop.f32.mrb[0].mxu0
        %v1799 = vadd.f32 %v1670, %v1798
        %v1800 = vpop.f32.mrb[0].mxu0
        %1801 = vmatprep.mubr.f32.mxu0 0.0
        %1802 = vmatmul.mubr.f32.gmra.mrb[0].mxu0 %v1702
        %v1803 = vpop.f32.mrb[0].mxu0
        %v1804 = vadd.f32 %v1675, %v1803
        %v1805 = vpop.f32.mrb[0].mxu0
        %1806 = vmatprep.mubr.f32.mxu0 0.0
        %1807 = vmatmul.mubr.f32.gmra.mrb[0].mxu0 %v1705
        %v1808 = vpop.f32.mrb[0].mxu0
        %v1809 = vadd.f32 %v1680, %v1808
        %v1810 = vpop.f32.mrb[0].mxu0
        %1811 = vdwg.mxu0
        %v1812 = vmul.f32 %v1774, 0.125
        %v1813 = vmul.f32 %v1779, 0.125
        %v1814 = vmul.f32 %v1784, 0.125
        %v1815 = vmul.f32 %v1789, 0.125
        %v1816 = vmul.f32 %v1794, 0.125
        %v1817 = vmul.f32 %v1799, 0.125
        %v1818 = vmul.f32 %v1804, 0.125
        %v1819 = vmul.f32 %v1809, 0.125
        %v1820 = vld [vmem:[#allocation2] sm:$0xff]
        %v1821 = vld [vmem:[#allocation2 + $0x8] sm:$0xff]
        %v1822 = vld [vmem:[#allocation2 + $0x10] sm:$0xff]
        %v1823 = vld [vmem:[#allocation2 + $0x18] sm:$0xff]
        %v1824 = vld [vmem:[#allocation2 + $0x20] sm:$0xff]
        %v1825 = vld [vmem:[#allocation2 + $0x28] sm:$0xff]
        %v1826 = vld [vmem:[#allocation2 + $0x30] sm:$0xff]
        %v1827 = vld [vmem:[#allocation2 + $0x38] sm:$0xff]
        %v1828 = vld [vmem:[#allocation2 + $0x40] sm:$0xff]
        %v1829 = vld [vmem:[#allocation2 + $0x48] sm:$0xff]
        %v1830 = vld [vmem:[#allocation2 + $0x50] sm:$0xff]
        %v1831 = vld [vmem:[#allocation2 + $0x58] sm:$0xff]
        %v1832 = vld [vmem:[#allocation2 + $0x60] sm:$0xff]
        %v1833 = vld [vmem:[#allocation2 + $0x68] sm:$0xff]
        %v1834 = vld [vmem:[#allocation2 + $0x70] sm:$0xff]
        %v1835 = vld [vmem:[#allocation2 + $0x78] sm:$0xff]
        %v1836 = vld [vmem:[#allocation2 + $0x80] sm:$0xff]
        %v1837 = vld [vmem:[#allocation2 + $0x88] sm:$0xff]
        %v1838 = vld [vmem:[#allocation2 + $0x90] sm:$0xff]
        %v1839 = vld [vmem:[#allocation2 + $0x98] sm:$0xff]
        %v1840 = vld [vmem:[#allocation2 + $0xa0] sm:$0xff]
        %v1841 = vld [vmem:[#allocation2 + $0xa8] sm:$0xff]
        %v1842 = vld [vmem:[#allocation2 + $0xb0] sm:$0xff]
        %v1843 = vld [vmem:[#allocation2 + $0xb8] sm:$0xff]
        %v1844 = vld [vmem:[#allocation2 + $0xc0] sm:$0xff]
        %v1845 = vld [vmem:[#allocation2 + $0xc8] sm:$0xff]
        %v1846 = vld [vmem:[#allocation2 + $0xd0] sm:$0xff]
        %v1847 = vld [vmem:[#allocation2 + $0xd8] sm:$0xff]
        %v1848 = vld [vmem:[#allocation2 + $0xe0] sm:$0xff]
        %v1849 = vld [vmem:[#allocation2 + $0xe8] sm:$0xff]
        %v1850 = vld [vmem:[#allocation2 + $0xf0] sm:$0xff]
        %v1851 = vld [vmem:[#allocation2 + $0xf8] sm:$0xff]
        %1852 = vxpose.xlu0.b32.start [1/16] %v1812, 128
        %1853 = vxpose.xlu0.b32.cont [2/16] %v1813, 128
        %1854 = vxpose.xlu0.b32.cont [3/16] %v1814, 128
        %1855 = vxpose.xlu0.b32.cont [4/16] %v1815, 128
        %1856 = vxpose.xlu0.b32.cont [5/16] %v1816, 128
        %1857 = vxpose.xlu0.b32.cont [6/16] %v1817, 128
        %1858 = vxpose.xlu0.b32.cont [7/16] %v1818, 128
        %1859 = vxpose.xlu0.b32.cont [8/16] %v1819, 128
        %1860 = vxpose.xlu0.b32.cont [9/16] 0.0, 128
        %1861 = vxpose.xlu0.b32.cont [10/16] 0.0, 128
        %1862 = vxpose.xlu0.b32.cont [11/16] 0.0, 128
        %1863 = vxpose.xlu0.b32.cont [12/16] 0.0, 128
        %1864 = vxpose.xlu0.b32.cont [13/16] 0.0, 128
        %1865 = vxpose.xlu0.b32.cont [14/16] 0.0, 128
        %1866 = vxpose.xlu0.b32.cont [15/16] 0.0, 128
        %1867 = vxpose.xlu0.b32.end [16/16] 0.0, 128
        %v1868 = vpop.trf.xlu0
        %v1869 = vpop.trf.xlu0
        %v1870 = vpop.trf.xlu0
        %v1871 = vpop.trf.xlu0
        %v1872 = vpop.trf.xlu0
        %v1873 = vpop.trf.xlu0
        %v1874 = vpop.trf.xlu0
        %v1875 = vpop.trf.xlu0
        %v1876 = vpop.trf.xlu0
        %v1877 = vpop.trf.xlu0
        %v1878 = vpop.trf.xlu0
        %v1879 = vpop.trf.xlu0
        %v1880 = vpop.trf.xlu0
        %v1881 = vpop.trf.xlu0
        %v1882 = vpop.trf.xlu0
        %v1883 = vpop.trf.xlu0
        %v1885 = vsel %vm1682, %v1868, 0
        %v1888 = vsel %vm1682, %v1869, 0
        %v1891 = vsel %vm1682, %v1870, 0
        %v1894 = vsel %vm1682, %v1871, 0
        %v1897 = vsel %vm1682, %v1872, 0
        %v1900 = vsel %vm1682, %v1873, 0
        %v1903 = vsel %vm1682, %v1874, 0
        %v1906 = vsel %vm1682, %v1875, 0
        %v1909 = vsel %vm1682, %v1876, 0
        %v1912 = vsel %vm1682, %v1877, 0
        %v1915 = vsel %vm1682, %v1878, 0
        %v1918 = vsel %vm1682, %v1879, 0
        %v1921 = vsel %vm1682, %v1880, 0
        %v1924 = vsel %vm1682, %v1881, 0
        %v1927 = vsel %vm1682, %v1882, 0
        %v1930 = vsel %vm1682, %v1883, 0
        %1932 = vmatprep.subr.mxu0 %v1821
        %1933 = vmatpush1.msra.mxu0 %v1820
        %1934 = vmatprep.subr.mxu0 %v1823
        %1935 = vmatpush1.msra.mxu0 %v1822
        %1936 = vmatprep.subr.mxu0 %v1825
        %1937 = vmatpush1.msra.mxu0 %v1824
        %1938 = vmatprep.subr.mxu0 %v1827
        %1939 = vmatpush1.msra.mxu0 %v1826
        %1940 = vmatprep.subr.mxu0 %v1829
        %1941 = vmatpush1.msra.mxu0 %v1828
        %1942 = vmatprep.subr.mxu0 %v1831
        %1943 = vmatpush1.msra.mxu0 %v1830
        %1944 = vmatprep.subr.mxu0 %v1833
        %1945 = vmatpush1.msra.mxu0 %v1832
        %1946 = vmatprep.subr.mxu0 %v1835
        %1947 = vmatpush1.msra.mxu0 %v1834
        %1948 = vmatprep.subr.mxu0 0.0
        %1949 = vmatpush1.msra.mxu0 0.0
        %1950 = vmatprep.subr.mxu0 0.0
        %1951 = vmatpush1.msra.mxu0 0.0
        %1952 = vmatprep.subr.mxu0 0.0
        %1953 = vmatpush1.msra.mxu0 0.0
        %1954 = vmatprep.subr.mxu0 0.0
        %1955 = vmatpush1.msra.mxu0 0.0
        %1956 = vmatprep.subr.mxu0 0.0
        %1957 = vmatpush1.msra.mxu0 0.0
        %1958 = vmatprep.subr.mxu0 0.0
        %1959 = vmatpush1.msra.mxu0 0.0
        %1960 = vmatprep.subr.mxu0 0.0
        %1961 = vmatpush1.msra.mxu0 0.0
        %1962 = vmatprep.subr.mxu0 0.0
        %1963 = vmatpush1.msra.mxu0 0.0
        %1964 = vmatprep.subr.mxu0 0.0
        %1965 = vmatpush1.msra.mxu0 0.0
        %1966 = vmatprep.subr.mxu0 0.0
        %1967 = vmatpush1.msra.mxu0 0.0
        %1968 = vmatprep.subr.mxu0 0.0
        %1969 = vmatpush1.msra.mxu0 0.0
        %1970 = vmatprep.subr.mxu0 0.0
        %1971 = vmatpush1.msra.mxu0 0.0
        %1972 = vmatprep.subr.mxu0 0.0
        %1973 = vmatpush1.msra.mxu0 0.0
        %1974 = vmatprep.subr.mxu0 0.0
        %1975 = vmatpush1.msra.mxu0 0.0
        %1976 = vmatprep.subr.mxu0 0.0
        %1977 = vmatpush1.msra.mxu0 0.0
        %1978 = vmatprep.subr.mxu0 0.0
        %1979 = vmatpush1.msra.mxu0 0.0
        %1980 = vmatprep.subr.mxu0 0.0
        %1981 = vmatpush1.msra.mxu0 0.0
        %1982 = vmatprep.subr.mxu0 0.0
        %1983 = vmatpush1.msra.mxu0 0.0
        %1984 = vmatprep.subr.mxu0 0.0
        %1985 = vmatpush1.msra.mxu0 0.0
        %1986 = vmatprep.subr.mxu0 0.0
        %1987 = vmatpush1.msra.mxu0 0.0
        %1988 = vmatprep.subr.mxu0 0.0
        %1989 = vmatpush1.msra.mxu0 0.0
        %1990 = vmatprep.subr.mxu0 0.0
        %1991 = vmatpush1.msra.mxu0 0.0
        %1992 = vmatprep.subr.mxu0 0.0
        %1993 = vmatpush1.msra.mxu0 0.0
        %1994 = vmatprep.subr.mxu0 0.0
        %1995 = vmatpush1.msra.mxu0 0.0
        %1996 = vmatprep.mubr.f32.mxu0 0.0
        %1997 = vmatmul.mubr.f32.gmra.mrb[0].mxu0 %v1885
        %v1998 = vpop.f32.mrb[0].mxu0
        %v1999 = vadd.f32 0.0, %v1998
        %v2000 = vpop.f32.mrb[0].mxu0
        %v2001 = vadd.f32 0.0, %v2000
        %2002 = vmatprep.mubr.f32.mxu0 0.0
        %2003 = vmatmul.mubr.f32.gmra.mrb[0].mxu0 %v1888
        %v2004 = vpop.f32.mrb[0].mxu0
        %v2005 = vadd.f32 0.0, %v2004
        %v2006 = vpop.f32.mrb[0].mxu0
        %v2007 = vadd.f32 0.0, %v2006
        %2008 = vmatprep.mubr.f32.mxu0 0.0
        %2009 = vmatmul.mubr.f32.gmra.mrb[0].mxu0 %v1891
        %v2010 = vpop.f32.mrb[0].mxu0
        %v2011 = vadd.f32 0.0, %v2010
        %v2012 = vpop.f32.mrb[0].mxu0
        %v2013 = vadd.f32 0.0, %v2012
        %2014 = vmatprep.mubr.f32.mxu0 0.0
        %2015 = vmatmul.mubr.f32.gmra.mrb[0].mxu0 %v1894
        %v2016 = vpop.f32.mrb[0].mxu0
        %v2017 = vadd.f32 0.0, %v2016
        %v2018 = vpop.f32.mrb[0].mxu0
        %v2019 = vadd.f32 0.0, %v2018
        %2020 = vmatprep.mubr.f32.mxu0 0.0
        %2021 = vmatmul.mubr.f32.gmra.mrb[0].mxu0 %v1897
        %v2022 = vpop.f32.mrb[0].mxu0
        %v2023 = vadd.f32 0.0, %v2022
        %v2024 = vpop.f32.mrb[0].mxu0
        %v2025 = vadd.f32 0.0, %v2024
        %2026 = vmatprep.mubr.f32.mxu0 0.0
        %2027 = vmatmul.mubr.f32.gmra.mrb[0].mxu0 %v1900
        %v2028 = vpop.f32.mrb[0].mxu0
        %v2029 = vadd.f32 0.0, %v2028
        %v2030 = vpop.f32.mrb[0].mxu0
        %v2031 = vadd.f32 0.0, %v2030
        %2032 = vmatprep.mubr.f32.mxu0 0.0
        %2033 = vmatmul.mubr.f32.gmra.mrb[0].mxu0 %v1903
        %v2034 = vpop.f32.mrb[0].mxu0
        %v2035 = vadd.f32 0.0, %v2034
        %v2036 = vpop.f32.mrb[0].mxu0
        %v2037 = vadd.f32 0.0, %v2036
        %2038 = vmatprep.mubr.f32.mxu0 0.0
        %2039 = vmatmul.mubr.f32.gmra.mrb[0].mxu0 %v1906
        %v2040 = vpop.f32.mrb[0].mxu0
        %v2041 = vadd.f32 0.0, %v2040
        %v2042 = vpop.f32.mrb[0].mxu0
        %v2043 = vadd.f32 0.0, %v2042
        %2044 = vmatprep.mubr.f32.mxu0 0.0
        %2045 = vmatmul.mubr.f32.gmra.mrb[0].mxu0 %v1909
        %v2046 = vpop.f32.mrb[0].mxu0
        %v2047 = vadd.f32 0.0, %v2046
        %v2048 = vpop.f32.mrb[0].mxu0
        %v2049 = vadd.f32 0.0, %v2048
        %2050 = vmatprep.mubr.f32.mxu0 0.0
        %2051 = vmatmul.mubr.f32.gmra.mrb[0].mxu0 %v1912
        %v2052 = vpop.f32.mrb[0].mxu0
        %v2053 = vadd.f32 0.0, %v2052
        %v2054 = vpop.f32.mrb[0].mxu0
        %v2055 = vadd.f32 0.0, %v2054
        %2056 = vmatprep.mubr.f32.mxu0 0.0
        %2057 = vmatmul.mubr.f32.gmra.mrb[0].mxu0 %v1915
        %v2058 = vpop.f32.mrb[0].mxu0
        %v2059 = vadd.f32 0.0, %v2058
        %v2060 = vpop.f32.mrb[0].mxu0
        %v2061 = vadd.f32 0.0, %v2060
        %2062 = vmatprep.mubr.f32.mxu0 0.0
        %2063 = vmatmul.mubr.f32.gmra.mrb[0].mxu0 %v1918
        %v2064 = vpop.f32.mrb[0].mxu0
        %v2065 = vadd.f32 0.0, %v2064
        %v2066 = vpop.f32.mrb[0].mxu0
        %v2067 = vadd.f32 0.0, %v2066
        %2068 = vmatprep.mubr.f32.mxu0 0.0
        %2069 = vmatmul.mubr.f32.gmra.mrb[0].mxu0 %v1921
        %v2070 = vpop.f32.mrb[0].mxu0
        %v2071 = vadd.f32 0.0, %v2070
        %v2072 = vpop.f32.mrb[0].mxu0
        %v2073 = vadd.f32 0.0, %v2072
        %2074 = vmatprep.mubr.f32.mxu0 0.0
        %2075 = vmatmul.mubr.f32.gmra.mrb[0].mxu0 %v1924
        %v2076 = vpop.f32.mrb[0].mxu0
        %v2077 = vadd.f32 0.0, %v2076
        %v2078 = vpop.f32.mrb[0].mxu0
        %v2079 = vadd.f32 0.0, %v2078
        %2080 = vmatprep.mubr.f32.mxu0 0.0
        %2081 = vmatmul.mubr.f32.gmra.mrb[0].mxu0 %v1927
        %v2082 = vpop.f32.mrb[0].mxu0
        %v2083 = vadd.f32 0.0, %v2082
        %v2084 = vpop.f32.mrb[0].mxu0
        %v2085 = vadd.f32 0.0, %v2084
        %2086 = vmatprep.mubr.f32.mxu0 0.0
        %2087 = vmatmul.mubr.f32.gmra.mrb[0].mxu0 %v1930
        %v2088 = vpop.f32.mrb[0].mxu0
        %v2089 = vadd.f32 0.0, %v2088
        %v2090 = vpop.f32.mrb[0].mxu0
        %v2091 = vadd.f32 0.0, %v2090
        %2092 = vdwg.mxu0
        %v2093 = vmax.f32 %v1999, %v2001
        %2094 = vmax.xlane.f32.xlu0 %v2093
        %v2095 = vpop.xlane.xlu0 %2094
        %v2096 = vmax.f32 %v2005, %v2007
        %2097 = vmax.xlane.f32.xlu0 %v2096
        %v2098 = vpop.xlane.xlu0 %2097
        %v2099 = vmax.f32 %v2011, %v2013
        %2100 = vmax.xlane.f32.xlu0 %v2099
        %v2101 = vpop.xlane.xlu0 %2100
        %v2102 = vmax.f32 %v2017, %v2019
        %2103 = vmax.xlane.f32.xlu0 %v2102
        %v2104 = vpop.xlane.xlu0 %2103
        %v2105 = vmax.f32 %v2023, %v2025
        %2106 = vmax.xlane.f32.xlu0 %v2105
        %v2107 = vpop.xlane.xlu0 %2106
        %v2108 = vmax.f32 %v2029, %v2031
        %2109 = vmax.xlane.f32.xlu0 %v2108
        %v2110 = vpop.xlane.xlu0 %2109
        %v2111 = vmax.f32 %v2035, %v2037
        %2112 = vmax.xlane.f32.xlu0 %v2111
        %v2113 = vpop.xlane.xlu0 %2112
        %v2114 = vmax.f32 %v2041, %v2043
        %2115 = vmax.xlane.f32.xlu0 %v2114
        %v2116 = vpop.xlane.xlu0 %2115
        %v2117 = vmax.f32 %v2047, %v2049
        %2118 = vmax.xlane.f32.xlu0 %v2117
        %v2119 = vpop.xlane.xlu0 %2118
        %v2120 = vmax.f32 %v2053, %v2055
        %2121 = vmax.xlane.f32.xlu0 %v2120
        %v2122 = vpop.xlane.xlu0 %2121
        %v2123 = vmax.f32 %v2059, %v2061
        %2124 = vmax.xlane.f32.xlu0 %v2123
        %v2125 = vpop.xlane.xlu0 %2124
        %v2126 = vmax.f32 %v2065, %v2067
        %2127 = vmax.xlane.f32.xlu0 %v2126
        %v2128 = vpop.xlane.xlu0 %2127
        %v2129 = vmax.f32 %v2071, %v2073
        %2130 = vmax.xlane.f32.xlu0 %v2129
        %v2131 = vpop.xlane.xlu0 %2130
        %v2132 = vmax.f32 %v2077, %v2079
        %2133 = vmax.xlane.f32.xlu0 %v2132
        %v2134 = vpop.xlane.xlu0 %2133
        %v2135 = vmax.f32 %v2083, %v2085
        %2136 = vmax.xlane.f32.xlu0 %v2135
        %v2137 = vpop.xlane.xlu0 %2136
        %v2138 = vmax.f32 %v2089, %v2091
        %2139 = vmax.xlane.f32.xlu0 %v2138
        %v2140 = vpop.xlane.xlu0 %2139
        %v2141 = vsub.f32 %v1999, %v2095
        %v2142 = vsub.f32 %v2001, %v2095
        %v2143 = vsub.f32 %v2005, %v2098
        %v2144 = vsub.f32 %v2007, %v2098
        %v2145 = vsub.f32 %v2011, %v2101
        %v2146 = vsub.f32 %v2013, %v2101
        %v2147 = vsub.f32 %v2017, %v2104
        %v2148 = vsub.f32 %v2019, %v2104
        %v2149 = vsub.f32 %v2023, %v2107
        %v2150 = vsub.f32 %v2025, %v2107
        %v2151 = vsub.f32 %v2029, %v2110
        %v2152 = vsub.f32 %v2031, %v2110
        %v2153 = vsub.f32 %v2035, %v2113
        %v2154 = vsub.f32 %v2037, %v2113
        %v2155 = vsub.f32 %v2041, %v2116
        %v2156 = vsub.f32 %v2043, %v2116
        %v2157 = vsub.f32 %v2047, %v2119
        %v2158 = vsub.f32 %v2049, %v2119
        %v2159 = vsub.f32 %v2053, %v2122
        %v2160 = vsub.f32 %v2055, %v2122
        %v2161 = vsub.f32 %v2059, %v2125
        %v2162 = vsub.f32 %v2061, %v2125
        %v2163 = vsub.f32 %v2065, %v2128
        %v2164 = vsub.f32 %v2067, %v2128
        %v2165 = vsub.f32 %v2071, %v2131
        %v2166 = vsub.f32 %v2073, %v2131
        %v2167 = vsub.f32 %v2077, %v2134
        %v2168 = vsub.f32 %v2079, %v2134
        %v2169 = vsub.f32 %v2083, %v2137
        %v2170 = vsub.f32 %v2085, %v2137
        %v2171 = vsub.f32 %v2089, %v2140
        %v2172 = vsub.f32 %v2091, %v2140
        %v2173 = vmul.f32 %v2141, 1.442695
        %v2174 = vpow.pop %v2173
        %v2175 = vmul.f32 %v2142, 1.442695
        %v2176 = vpow.pop %v2175
        %v2177 = vmul.f32 %v2143, 1.442695
        %v2178 = vpow.pop %v2177
        %v2179 = vmul.f32 %v2144, 1.442695
        %v2180 = vpow.pop %v2179
        %v2181 = vmul.f32 %v2145, 1.442695
        %v2182 = vpow.pop %v2181
        %v2183 = vmul.f32 %v2146, 1.442695
        %v2184 = vpow.pop %v2183
        %v2185 = vmul.f32 %v2147, 1.442695
        %v2186 = vpow.pop %v2185
        %v2187 = vmul.f32 %v2148, 1.442695
        %v2188 = vpow.pop %v2187
        %v2189 = vmul.f32 %v2149, 1.442695
        %v2190 = vpow.pop %v2189
        %v2191 = vmul.f32 %v2150, 1.442695
        %v2192 = vpow.pop %v2191
        %v2193 = vmul.f32 %v2151, 1.442695
        %v2194 = vpow.pop %v2193
        %v2195 = vmul.f32 %v2152, 1.442695
        %v2196 = vpow.pop %v2195
        %v2197 = vmul.f32 %v2153, 1.442695
        %v2198 = vpow.pop %v2197
        %v2199 = vmul.f32 %v2154, 1.442695
        %v2200 = vpow.pop %v2199
        %v2201 = vmul.f32 %v2155, 1.442695
        %v2202 = vpow.pop %v2201
        %v2203 = vmul.f32 %v2156, 1.442695
        %v2204 = vpow.pop %v2203
        %v2205 = vmul.f32 %v2157, 1.442695
        %v2206 = vpow.pop %v2205
        %v2207 = vmul.f32 %v2158, 1.442695
        %v2208 = vpow.pop %v2207
        %v2209 = vmul.f32 %v2159, 1.442695
        %v2210 = vpow.pop %v2209
        %v2211 = vmul.f32 %v2160, 1.442695
        %v2212 = vpow.pop %v2211
        %v2213 = vmul.f32 %v2161, 1.442695
        %v2214 = vpow.pop %v2213
        %v2215 = vmul.f32 %v2162, 1.442695
        %v2216 = vpow.pop %v2215
        %v2217 = vmul.f32 %v2163, 1.442695
        %v2218 = vpow.pop %v2217
        %v2219 = vmul.f32 %v2164, 1.442695
        %v2220 = vpow.pop %v2219
        %v2221 = vmul.f32 %v2165, 1.442695
        %v2222 = vpow.pop %v2221
        %v2223 = vmul.f32 %v2166, 1.442695
        %v2224 = vpow.pop %v2223
        %v2225 = vmul.f32 %v2167, 1.442695
        %v2226 = vpow.pop %v2225
        %v2227 = vmul.f32 %v2168, 1.442695
        %v2228 = vpow.pop %v2227
        %v2229 = vmul.f32 %v2169, 1.442695
        %v2230 = vpow.pop %v2229
        %v2231 = vmul.f32 %v2170, 1.442695
        %v2232 = vpow.pop %v2231
        %v2233 = vmul.f32 %v2171, 1.442695
        %v2234 = vpow.pop %v2233
        %v2235 = vmul.f32 %v2172, 1.442695
        %v2236 = vpow.pop %v2235
        %v2237 = vadd.f32 %v2174, %v2176
        %2238 = vadd.xlane.f32.xlu0 %v2237
        %v2239 = vpop.xlane.xlu0 %2238
        %v2240 = vadd.f32 %v2178, %v2180
        %2241 = vadd.xlane.f32.xlu0 %v2240
        %v2242 = vpop.xlane.xlu0 %2241
        %v2243 = vadd.f32 %v2182, %v2184
        %2244 = vadd.xlane.f32.xlu0 %v2243
        %v2245 = vpop.xlane.xlu0 %2244
        %v2246 = vadd.f32 %v2186, %v2188
        %2247 = vadd.xlane.f32.xlu0 %v2246
        %v2248 = vpop.xlane.xlu0 %2247
        %v2249 = vadd.f32 %v2190, %v2192
        %2250 = vadd.xlane.f32.xlu0 %v2249
        %v2251 = vpop.xlane.xlu0 %2250
        %v2252 = vadd.f32 %v2194, %v2196
        %2253 = vadd.xlane.f32.xlu0 %v2252
        %v2254 = vpop.xlane.xlu0 %2253
        %v2255 = vadd.f32 %v2198, %v2200
        %2256 = vadd.xlane.f32.xlu0 %v2255
        %v2257 = vpop.xlane.xlu0 %2256
        %v2258 = vadd.f32 %v2202, %v2204
        %2259 = vadd.xlane.f32.xlu0 %v2258
        %v2260 = vpop.xlane.xlu0 %2259
        %v2261 = vadd.f32 %v2206, %v2208
        %2262 = vadd.xlane.f32.xlu0 %v2261
        %v2263 = vpop.xlane.xlu0 %2262
        %v2264 = vadd.f32 %v2210, %v2212
        %2265 = vadd.xlane.f32.xlu0 %v2264
        %v2266 = vpop.xlane.xlu0 %2265
        %v2267 = vadd.f32 %v2214, %v2216
        %2268 = vadd.xlane.f32.xlu0 %v2267
        %v2269 = vpop.xlane.xlu0 %2268
        %v2270 = vadd.f32 %v2218, %v2220
        %2271 = vadd.xlane.f32.xlu0 %v2270
        %v2272 = vpop.xlane.xlu0 %2271
        %v2273 = vadd.f32 %v2222, %v2224
        %2274 = vadd.xlane.f32.xlu0 %v2273
        %v2275 = vpop.xlane.xlu0 %2274
        %v2276 = vadd.f32 %v2226, %v2228
        %2277 = vadd.xlane.f32.xlu0 %v2276
        %v2278 = vpop.xlane.xlu0 %2277
        %v2279 = vadd.f32 %v2230, %v2232
        %2280 = vadd.xlane.f32.xlu0 %v2279
        %v2281 = vpop.xlane.xlu0 %2280
        %v2282 = vadd.f32 %v2234, %v2236
        %2283 = vadd.xlane.f32.xlu0 %v2282
        %v2284 = vpop.xlane.xlu0 %2283
        %v2285 = vrcp.pop %v2239
        %v2286 = vrcp.pop %v2242
        %v2287 = vrcp.pop %v2245
        %v2288 = vrcp.pop %v2248
        %v2289 = vrcp.pop %v2251
        %v2290 = vrcp.pop %v2254
        %v2291 = vrcp.pop %v2257
        %v2292 = vrcp.pop %v2260
        %v2293 = vrcp.pop %v2263
        %v2294 = vrcp.pop %v2266
        %v2295 = vrcp.pop %v2269
        %v2296 = vrcp.pop %v2272
        %v2297 = vrcp.pop %v2275
        %v2298 = vrcp.pop %v2278
        %v2299 = vrcp.pop %v2281
        %v2300 = vrcp.pop %v2284
        %v2301 = vmul.f32 %v2174, %v2285
        %v2302 = vmul.f32 %v2176, %v2285
        %v2303 = vmul.f32 %v2178, %v2286
        %v2304 = vmul.f32 %v2180, %v2286
        %v2305 = vmul.f32 %v2182, %v2287
        %v2306 = vmul.f32 %v2184, %v2287
        %v2307 = vmul.f32 %v2186, %v2288
        %v2308 = vmul.f32 %v2188, %v2288
        %v2309 = vmul.f32 %v2190, %v2289
        %v2310 = vmul.f32 %v2192, %v2289
        %v2311 = vmul.f32 %v2194, %v2290
        %v2312 = vmul.f32 %v2196, %v2290
        %v2313 = vmul.f32 %v2198, %v2291
        %v2314 = vmul.f32 %v2200, %v2291
        %v2315 = vmul.f32 %v2202, %v2292
        %v2316 = vmul.f32 %v2204, %v2292
        %v2317 = vmul.f32 %v2206, %v2293
        %v2318 = vmul.f32 %v2208, %v2293
        %v2319 = vmul.f32 %v2210, %v2294
        %v2320 = vmul.f32 %v2212, %v2294
        %v2321 = vmul.f32 %v2214, %v2295
        %v2322 = vmul.f32 %v2216, %v2295
        %v2323 = vmul.f32 %v2218, %v2296
        %v2324 = vmul.f32 %v2220, %v2296
        %v2325 = vmul.f32 %v2222, %v2297
        %v2326 = vmul.f32 %v2224, %v2297
        %v2327 = vmul.f32 %v2226, %v2298
        %v2328 = vmul.f32 %v2228, %v2298
        %v2329 = vmul.f32 %v2230, %v2299
        %v2330 = vmul.f32 %v2232, %v2299
        %v2331 = vmul.f32 %v2234, %v2300
        %v2332 = vmul.f32 %v2236, %v2300
        %2333 = vxpose.xlu0.b32.start [1/16] %v2301, 128
        %2334 = vxpose.xlu0.b32.cont [2/16] %v2303, 128
        %2335 = vxpose.xlu0.b32.cont [3/16] %v2305, 128
        %2336 = vxpose.xlu0.b32.cont [4/16] %v2307, 128
        %2337 = vxpose.xlu0.b32.cont [5/16] %v2309, 128
        %2338 = vxpose.xlu0.b32.cont [6/16] %v2311, 128
        %2339 = vxpose.xlu0.b32.cont [7/16] %v2313, 128
        %2340 = vxpose.xlu0.b32.cont [8/16] %v2315, 128
        %2341 = vxpose.xlu0.b32.cont [9/16] %v2317, 128
        %2342 = vxpose.xlu0.b32.cont [10/16] %v2319, 128
        %2343 = vxpose.xlu0.b32.cont [11/16] %v2321, 128
        %2344 = vxpose.xlu0.b32.cont [12/16] %v2323, 128
        %2345 = vxpose.xlu0.b32.cont [13/16] %v2325, 128
        %2346 = vxpose.xlu0.b32.cont [14/16] %v2327, 128
        %2347 = vxpose.xlu0.b32.cont [15/16] %v2329, 128
        %2348 = vxpose.xlu0.b32.end [16/16] %v2331, 128
        %v2349 = vpop.trf.xlu0
        %v2350 = vpop.trf.xlu0
        %v2351 = vpop.trf.xlu0
        %v2352 = vpop.trf.xlu0
        %v2353 = vpop.trf.xlu0
        %v2354 = vpop.trf.xlu0
        %v2355 = vpop.trf.xlu0
        %v2356 = vpop.trf.xlu0
        %v2357 = vpop.trf.xlu0
        %v2358 = vpop.trf.xlu0
        %v2359 = vpop.trf.xlu0
        %v2360 = vpop.trf.xlu0
        %v2361 = vpop.trf.xlu0
        %v2362 = vpop.trf.xlu0
        %v2363 = vpop.trf.xlu0
        %v2364 = vpop.trf.xlu0
        %2365 = vxpose.xlu0.b32.start [1/16] %v2302, 128
        %2366 = vxpose.xlu0.b32.cont [2/16] %v2304, 128
        %2367 = vxpose.xlu0.b32.cont [3/16] %v2306, 128
        %2368 = vxpose.xlu0.b32.cont [4/16] %v2308, 128
        %2369 = vxpose.xlu0.b32.cont [5/16] %v2310, 128
        %2370 = vxpose.xlu0.b32.cont [6/16] %v2312, 128
        %2371 = vxpose.xlu0.b32.cont [7/16] %v2314, 128
        %2372 = vxpose.xlu0.b32.cont [8/16] %v2316, 128
        %2373 = vxpose.xlu0.b32.cont [9/16] %v2318, 128
        %2374 = vxpose.xlu0.b32.cont [10/16] %v2320, 128
        %2375 = vxpose.xlu0.b32.cont [11/16] %v2322, 128
        %2376 = vxpose.xlu0.b32.cont [12/16] %v2324, 128
        %2377 = vxpose.xlu0.b32.cont [13/16] %v2326, 128
        %2378 = vxpose.xlu0.b32.cont [14/16] %v2328, 128
        %2379 = vxpose.xlu0.b32.cont [15/16] %v2330, 128
        %2380 = vxpose.xlu0.b32.end [16/16] %v2332, 128
        %v2381 = vpop.trf.xlu0
        %v2382 = vpop.trf.xlu0
        %v2383 = vpop.trf.xlu0
        %v2384 = vpop.trf.xlu0
        %v2385 = vpop.trf.xlu0
        %v2386 = vpop.trf.xlu0
        %v2387 = vpop.trf.xlu0
        %v2388 = vpop.trf.xlu0
        %v2389 = vpop.trf.xlu0
        %v2390 = vpop.trf.xlu0
        %v2391 = vpop.trf.xlu0
        %v2392 = vpop.trf.xlu0
        %v2393 = vpop.trf.xlu0
        %v2394 = vpop.trf.xlu0
        %v2395 = vpop.trf.xlu0
        %v2396 = vpop.trf.xlu0
        %2397 = vst [vmem:[%s433] sm:$0xff] %v2349
        %2398 = vst [vmem:[%s433 + $0x8] sm:$0xff] %v2350
        %2399 = vst [vmem:[%s433 + $0x10] sm:$0xff] %v2351
        %2400 = vst [vmem:[%s433 + $0x18] sm:$0xff] %v2352
        %2401 = vst [vmem:[%s433 + $0x20] sm:$0xff] %v2353
        %2402 = vst [vmem:[%s433 + $0x28] sm:$0xff] %v2354
        %2403 = vst [vmem:[%s433 + $0x30] sm:$0xff] %v2355
        %2404 = vst [vmem:[%s433 + $0x38] sm:$0xff] %v2356
        %2405 = vst [vmem:[%s433 + $0x40] sm:$0xff] %v2357
        %2406 = vst [vmem:[%s433 + $0x48] sm:$0xff] %v2358
        %2407 = vst [vmem:[%s433 + $0x50] sm:$0xff] %v2359
        %2408 = vst [vmem:[%s433 + $0x58] sm:$0xff] %v2360
        %2409 = vst [vmem:[%s433 + $0x60] sm:$0xff] %v2361
        %2410 = vst [vmem:[%s433 + $0x68] sm:$0xff] %v2362
        %2411 = vst [vmem:[%s433 + $0x70] sm:$0xff] %v2363
        %2412 = vst [vmem:[%s433 + $0x78] sm:$0xff] %v2364
        %2413 = vst [vmem:[%s433 + $0x80] sm:$0xff] %v2381
        %2414 = vst [vmem:[%s433 + $0x88] sm:$0xff] %v2382
        %2415 = vst [vmem:[%s433 + $0x90] sm:$0xff] %v2383
        %2416 = vst [vmem:[%s433 + $0x98] sm:$0xff] %v2384
        %2417 = vst [vmem:[%s433 + $0xa0] sm:$0xff] %v2385
        %2418 = vst [vmem:[%s433 + $0xa8] sm:$0xff] %v2386
        %2419 = vst [vmem:[%s433 + $0xb0] sm:$0xff] %v2387
        %2420 = vst [vmem:[%s433 + $0xb8] sm:$0xff] %v2388
        %2421 = vst [vmem:[%s433 + $0xc0] sm:$0xff] %v2389
        %2422 = vst [vmem:[%s433 + $0xc8] sm:$0xff] %v2390
        %2423 = vst [vmem:[%s433 + $0xd0] sm:$0xff] %v2391
        %2424 = vst [vmem:[%s433 + $0xd8] sm:$0xff] %v2392
        %2425 = vst [vmem:[%s433 + $0xe0] sm:$0xff] %v2393
        %2426 = vst [vmem:[%s433 + $0xe8] sm:$0xff] %v2394
        %2427 = vst [vmem:[%s433 + $0xf0] sm:$0xff] %v2395
        %2428 = vst [vmem:[%s433 + $0xf8] sm:$0xff] %v2396
        %2429 = vmatprep.subr.mxu0 0.0
        %2430 = vmatpush1.msra.mxu0 %v2349
        %2431 = vmatprep.subr.mxu0 0.0
        %2432 = vmatpush1.msra.mxu0 %v2350
        %2433 = vmatprep.subr.mxu0 0.0
        %2434 = vmatpush1.msra.mxu0 %v2351
        %2435 = vmatprep.subr.mxu0 0.0
        %2436 = vmatpush1.msra.mxu0 %v2352
        %2437 = vmatprep.subr.mxu0 0.0
        %2438 = vmatpush1.msra.mxu0 %v2353
        %2439 = vmatprep.subr.mxu0 0.0
        %2440 = vmatpush1.msra.mxu0 %v2354
        %2441 = vmatprep.subr.mxu0 0.0
        %2442 = vmatpush1.msra.mxu0 %v2355
        %2443 = vmatprep.subr.mxu0 0.0
        %2444 = vmatpush1.msra.mxu0 %v2356
        %2445 = vmatprep.subr.mxu0 0.0
        %2446 = vmatpush1.msra.mxu0 %v2357
        %2447 = vmatprep.subr.mxu0 0.0
        %2448 = vmatpush1.msra.mxu0 %v2358
        %2449 = vmatprep.subr.mxu0 0.0
        %2450 = vmatpush1.msra.mxu0 %v2359
        %2451 = vmatprep.subr.mxu0 0.0
        %2452 = vmatpush1.msra.mxu0 %v2360
        %2453 = vmatprep.subr.mxu0 0.0
        %2454 = vmatpush1.msra.mxu0 %v2361
        %2455 = vmatprep.subr.mxu0 0.0
        %2456 = vmatpush1.msra.mxu0 %v2362
        %2457 = vmatprep.subr.mxu0 0.0
        %2458 = vmatpush1.msra.mxu0 %v2363
        %2459 = vmatprep.subr.mxu0 0.0
        %2460 = vmatpush1.msra.mxu0 %v2364
        %2461 = vmatprep.subr.mxu0 0.0
        %2462 = vmatpush1.msra.mxu0 %v2381
        %2463 = vmatprep.subr.mxu0 0.0
        %2464 = vmatpush1.msra.mxu0 %v2382
        %2465 = vmatprep.subr.mxu0 0.0
        %2466 = vmatpush1.msra.mxu0 %v2383
        %2467 = vmatprep.subr.mxu0 0.0
        %2468 = vmatpush1.msra.mxu0 %v2384
        %2469 = vmatprep.subr.mxu0 0.0
        %2470 = vmatpush1.msra.mxu0 %v2385
        %2471 = vmatprep.subr.mxu0 0.0
        %2472 = vmatpush1.msra.mxu0 %v2386
        %2473 = vmatprep.subr.mxu0 0.0
        %2474 = vmatpush1.msra.mxu0 %v2387
        %2475 = vmatprep.subr.mxu0 0.0
        %2476 = vmatpush1.msra.mxu0 %v2388
        %2477 = vmatprep.subr.mxu0 0.0
        %2478 = vmatpush1.msra.mxu0 %v2389
        %2479 = vmatprep.subr.mxu0 0.0
        %2480 = vmatpush1.msra.mxu0 %v2390
        %2481 = vmatprep.subr.mxu0 0.0
        %2482 = vmatpush1.msra.mxu0 %v2391
        %2483 = vmatprep.subr.mxu0 0.0
        %2484 = vmatpush1.msra.mxu0 %v2392
        %2485 = vmatprep.subr.mxu0 0.0
        %2486 = vmatpush1.msra.mxu0 %v2393
        %2487 = vmatprep.subr.mxu0 0.0
        %2488 = vmatpush1.msra.mxu0 %v2394
        %2489 = vmatprep.subr.mxu0 0.0
        %2490 = vmatpush1.msra.mxu0 %v2395
        %2491 = vmatprep.subr.mxu0 0.0
        %2492 = vmatpush1.msra.mxu0 %v2396
        %2493 = vmatprep.mubr.f32.mxu0 %v1837
        %2494 = vmatmul.mubr.f32.gmra.mrb[0].mxu0 %v1836
        %v2495 = vpop.f32.mrb[0].mxu0
        %v2496 = vadd.f32 0.0, %v2495
        %v2497 = vpop.f32.mrb[0].mxu0
        %2498 = vmatprep.mubr.f32.mxu0 %v1839
        %2499 = vmatmul.mubr.f32.gmra.mrb[0].mxu0 %v1838
        %v2500 = vpop.f32.mrb[0].mxu0
        %v2501 = vadd.f32 0.0, %v2500
        %v2502 = vpop.f32.mrb[0].mxu0
        %2503 = vmatprep.mubr.f32.mxu0 %v1841
        %2504 = vmatmul.mubr.f32.gmra.mrb[0].mxu0 %v1840
        %v2505 = vpop.f32.mrb[0].mxu0
        %v2506 = vadd.f32 0.0, %v2505
        %v2507 = vpop.f32.mrb[0].mxu0
        %2508 = vmatprep.mubr.f32.mxu0 %v1843
        %2509 = vmatmul.mubr.f32.gmra.mrb[0].mxu0 %v1842
        %v2510 = vpop.f32.mrb[0].mxu0
        %v2511 = vadd.f32 0.0, %v2510
        %v2512 = vpop.f32.mrb[0].mxu0
        %2513 = vmatprep.mubr.f32.mxu0 %v1845
        %2514 = vmatmul.mubr.f32.gmra.mrb[0].mxu0 %v1844
        %v2515 = vpop.f32.mrb[0].mxu0
        %v2516 = vadd.f32 0.0, %v2515
        %v2517 = vpop.f32.mrb[0].mxu0
        %2518 = vmatprep.mubr.f32.mxu0 %v1847
        %2519 = vmatmul.mubr.f32.gmra.mrb[0].mxu0 %v1846
        %v2520 = vpop.f32.mrb[0].mxu0
        %v2521 = vadd.f32 0.0, %v2520
        %v2522 = vpop.f32.mrb[0].mxu0
        %2523 = vmatprep.mubr.f32.mxu0 %v1849
        %2524 = vmatmul.mubr.f32.gmra.mrb[0].mxu0 %v1848
        %v2525 = vpop.f32.mrb[0].mxu0
        %v2526 = vadd.f32 0.0, %v2525
        %v2527 = vpop.f32.mrb[0].mxu0
        %2528 = vmatprep.mubr.f32.mxu0 %v1851
        %2529 = vmatmul.mubr.f32.gmra.mrb[0].mxu0 %v1850
        %v2530 = vpop.f32.mrb[0].mxu0
        %v2531 = vadd.f32 0.0, %v2530
        %v2532 = vpop.f32.mrb[0].mxu0
        %2533 = vdwg.mxu0
        %v2534 = vld [vmem:[%s9] sm:$0xff]
        %v2535 = vld [vmem:[%s9 + $0x8] sm:$0xff]
        %v2536 = vld [vmem:[%s9 + $0x10] sm:$0xff]
        %v2537 = vld [vmem:[%s9 + $0x18] sm:$0xff]
        %v2538 = vld [vmem:[%s9 + $0x20] sm:$0xff]
        %v2539 = vld [vmem:[%s9 + $0x28] sm:$0xff]
        %v2540 = vld [vmem:[%s9 + $0x30] sm:$0xff]
        %v2541 = vld [vmem:[%s9 + $0x38] sm:$0xff]
        %v2542 = vld [vmem:[%s10] sm:$0xff]
        %v2543 = vld [vmem:[%s10 + $0x8] sm:$0xff]
        %v2544 = vld [vmem:[%s10 + $0x10] sm:$0xff]
        %v2545 = vld [vmem:[%s10 + $0x18] sm:$0xff]
        %v2546 = vld [vmem:[%s10 + $0x20] sm:$0xff]
        %v2547 = vld [vmem:[%s10 + $0x28] sm:$0xff]
        %v2548 = vld [vmem:[%s10 + $0x30] sm:$0xff]
        %v2549 = vld [vmem:[%s10 + $0x38] sm:$0xff]
        %2551 = vset.pattern.permute.xlu0 0
        %2552 = vperm.xlu0 %2551, %v2542
        %v2553 = vpop.permute.xlu0 %2552
        %2556 = vset.pattern.permute.xlu0 0
        %2557 = vperm.xlu0 %2556, %v2543
        %v2558 = vpop.permute.xlu0 %2557
        %2561 = vset.pattern.permute.xlu0 0
        %2562 = vperm.xlu0 %2561, %v2544
        %v2563 = vpop.permute.xlu0 %2562
        %2566 = vset.pattern.permute.xlu0 0
        %2567 = vperm.xlu0 %2566, %v2545
        %v2568 = vpop.permute.xlu0 %2567
        %2571 = vset.pattern.permute.xlu0 0
        %2572 = vperm.xlu0 %2571, %v2546
        %v2573 = vpop.permute.xlu0 %2572
        %2576 = vset.pattern.permute.xlu0 0
        %2577 = vperm.xlu0 %2576, %v2547
        %v2578 = vpop.permute.xlu0 %2577
        %2581 = vset.pattern.permute.xlu0 0
        %2582 = vperm.xlu0 %2581, %v2548
        %v2583 = vpop.permute.xlu0 %2582
        %2586 = vset.pattern.permute.xlu0 0
        %2587 = vperm.xlu0 %2586, %v2549
        %v2588 = vpop.permute.xlu0 %2587
        %v2591 = vsel %vm1682, %v2534, 0
        %v2594 = vsel %vm1682, %v2535, 0
        %v2597 = vsel %vm1682, %v2536, 0
        %v2600 = vsel %vm1682, %v2537, 0
        %v2603 = vsel %vm1682, %v2538, 0
        %v2606 = vsel %vm1682, %v2539, 0
        %v2609 = vsel %vm1682, %v2540, 0
        %v2612 = vsel %vm1682, %v2541, 0
        %2614 = vmatprep.subr.mxu0 0.0
        %2615 = vmatpush1.msra.mxu0 %v2496
        %2616 = vmatprep.subr.mxu0 0.0
        %2617 = vmatpush1.msra.mxu0 %v2501
        %2618 = vmatprep.subr.mxu0 0.0
        %2619 = vmatpush1.msra.mxu0 %v2506
        %2620 = vmatprep.subr.mxu0 0.0
        %2621 = vmatpush1.msra.mxu0 %v2511
        %2622 = vmatprep.subr.mxu0 0.0
        %2623 = vmatpush1.msra.mxu0 %v2516
        %2624 = vmatprep.subr.mxu0 0.0
        %2625 = vmatpush1.msra.mxu0 %v2521
        %2626 = vmatprep.subr.mxu0 0.0
        %2627 = vmatpush1.msra.mxu0 %v2526
        %2628 = vmatprep.subr.mxu0 0.0
        %2629 = vmatpush1.msra.mxu0 %v2531
        %2630 = vmatprep.subr.mxu0 0.0
        %2631 = vmatpush1.msra.mxu0 0.0
        %2632 = vmatprep.subr.mxu0 0.0
        %2633 = vmatpush1.msra.mxu0 0.0
        %2634 = vmatprep.subr.mxu0 0.0
        %2635 = vmatpush1.msra.mxu0 0.0
        %2636 = vmatprep.subr.mxu0 0.0
        %2637 = vmatpush1.msra.mxu0 0.0
        %2638 = vmatprep.subr.mxu0 0.0
        %2639 = vmatpush1.msra.mxu0 0.0
        %2640 = vmatprep.subr.mxu0 0.0
        %2641 = vmatpush1.msra.mxu0 0.0
        %2642 = vmatprep.subr.mxu0 0.0
        %2643 = vmatpush1.msra.mxu0 0.0
        %2644 = vmatprep.subr.mxu0 0.0
        %2645 = vmatpush1.msra.mxu0 0.0
        %2646 = vmatprep.subr.mxu0 0.0
        %2647 = vmatpush1.msra.mxu0 0.0
        %2648 = vmatprep.subr.mxu0 0.0
        %2649 = vmatpush1.msra.mxu0 0.0
        %2650 = vmatprep.subr.mxu0 0.0
        %2651 = vmatpush1.msra.mxu0 0.0
        %2652 = vmatprep.subr.mxu0 0.0
        %2653 = vmatpush1.msra.mxu0 0.0
        %2654 = vmatprep.subr.mxu0 0.0
        %2655 = vmatpush1.msra.mxu0 0.0
        %2656 = vmatprep.subr.mxu0 0.0
        %2657 = vmatpush1.msra.mxu0 0.0
        %2658 = vmatprep.subr.mxu0 0.0
        %2659 = vmatpush1.msra.mxu0 0.0
        %2660 = vmatprep.subr.mxu0 0.0
        %2661 = vmatpush1.msra.mxu0 0.0
        %2662 = vmatprep.subr.mxu0 0.0
        %2663 = vmatpush1.msra.mxu0 0.0
        %2664 = vmatprep.subr.mxu0 0.0
        %2665 = vmatpush1.msra.mxu0 0.0
        %2666 = vmatprep.subr.mxu0 0.0
        %2667 = vmatpush1.msra.mxu0 0.0
        %2668 = vmatprep.subr.mxu0 0.0
        %2669 = vmatpush1.msra.mxu0 0.0
        %2670 = vmatprep.subr.mxu0 0.0
        %2671 = vmatpush1.msra.mxu0 0.0
        %2672 = vmatprep.subr.mxu0 0.0
        %2673 = vmatpush1.msra.mxu0 0.0
        %2674 = vmatprep.subr.mxu0 0.0
        %2675 = vmatpush1.msra.mxu0 0.0
        %2676 = vmatprep.subr.mxu0 0.0
        %2677 = vmatpush1.msra.mxu0 0.0
        %2678 = vmatprep.mubr.f32.mxu0 0.0
        %2679 = vmatmul.mubr.f32.gmra.mrb[0].mxu0 %v2591
        %v2680 = vpop.f32.mrb[0].mxu0
        %v2681 = vadd.f32 %v2553, %v2680
        %v2682 = vpop.f32.mrb[0].mxu0
        %2683 = vmatprep.mubr.f32.mxu0 0.0
        %2684 = vmatmul.mubr.f32.gmra.mrb[0].mxu0 %v2594
        %v2685 = vpop.f32.mrb[0].mxu0
        %v2686 = vadd.f32 %v2558, %v2685
        %v2687 = vpop.f32.mrb[0].mxu0
        %2688 = vmatprep.mubr.f32.mxu0 0.0
        %2689 = vmatmul.mubr.f32.gmra.mrb[0].mxu0 %v2597
        %v2690 = vpop.f32.mrb[0].mxu0
        %v2691 = vadd.f32 %v2563, %v2690
        %v2692 = vpop.f32.mrb[0].mxu0
        %2693 = vmatprep.mubr.f32.mxu0 0.0
        %2694 = vmatmul.mubr.f32.gmra.mrb[0].mxu0 %v2600
        %v2695 = vpop.f32.mrb[0].mxu0
        %v2696 = vadd.f32 %v2568, %v2695
        %v2697 = vpop.f32.mrb[0].mxu0
        %2698 = vmatprep.mubr.f32.mxu0 0.0
        %2699 = vmatmul.mubr.f32.gmra.mrb[0].mxu0 %v2603
        %v2700 = vpop.f32.mrb[0].mxu0
        %v2701 = vadd.f32 %v2573, %v2700
        %v2702 = vpop.f32.mrb[0].mxu0
        %2703 = vmatprep.mubr.f32.mxu0 0.0
        %2704 = vmatmul.mubr.f32.gmra.mrb[0].mxu0 %v2606
        %v2705 = vpop.f32.mrb[0].mxu0
        %v2706 = vadd.f32 %v2578, %v2705
        %v2707 = vpop.f32.mrb[0].mxu0
        %2708 = vmatprep.mubr.f32.mxu0 0.0
        %2709 = vmatmul.mubr.f32.gmra.mrb[0].mxu0 %v2609
        %v2710 = vpop.f32.mrb[0].mxu0
        %v2711 = vadd.f32 %v2583, %v2710
        %v2712 = vpop.f32.mrb[0].mxu0
        %2713 = vmatprep.mubr.f32.mxu0 0.0
        %2714 = vmatmul.mubr.f32.gmra.mrb[0].mxu0 %v2612
        %v2715 = vpop.f32.mrb[0].mxu0
        %v2716 = vadd.f32 %v2588, %v2715
        %v2717 = vpop.f32.mrb[0].mxu0
        %2718 = vdwg.mxu0
        %v2719 = vadd.f32 %v1505, %v2681
        %v2720 = vadd.f32 %v1506, %v2686
        %v2721 = vadd.f32 %v1507, %v2691
        %v2722 = vadd.f32 %v1508, %v2696
        %v2723 = vadd.f32 %v1509, %v2701
        %v2724 = vadd.f32 %v1510, %v2706
        %v2725 = vadd.f32 %v1511, %v2711
        %v2726 = vadd.f32 %v1512, %v2716
        %2727 = vst [vmem:[%s426] sm:$0xff] %v2719
        %2728 = vst [vmem:[%s426 + $0x8] sm:$0xff] %v2720
        %2729 = vst [vmem:[%s426 + $0x10] sm:$0xff] %v2721
        %2730 = vst [vmem:[%s426 + $0x18] sm:$0xff] %v2722
        %2731 = vst [vmem:[%s426 + $0x20] sm:$0xff] %v2723
        %2732 = vst [vmem:[%s426 + $0x28] sm:$0xff] %v2724
        %2733 = vst [vmem:[%s426 + $0x30] sm:$0xff] %v2725
        %2734 = vst [vmem:[%s426 + $0x38] sm:$0xff] %v2726
        %s2735 = sand.u32 %s288, 1
        %s2736 = scalar_lea.sflag [#allocation5], %s2735
        %s2737 = sand.u32 %s288, 1
        %s2738 = smul.addr %s2737, 64
        %s2739 = scalar_lea.vmem [#allocation4], %s2738
        %s2740 = sand.u32 %s316, 1
        %s2741 = scalar_lea.sflag [#allocation7], %s2740
        %s2742 = sand.u32 %s316, 1
        %s2743 = smul.addr %s2742, 256
        %s2744 = scalar_lea.vmem [#allocation6], %s2743
        // Predicated region
        $region69: #{tpu_custom_call.1} parent=63 // pred_check
          %p2745 = pneg %p298
        $region70: #{tpu_custom_call.1} parent=63 // pred_check_branch
          %2747 = sbr.rel (%p2745) target = $region72
        $region71: #{tpu_custom_call.1} parent=63 // pred_region
          %s2749 = ssub.s32 1024, 1024
          %2750 = vsyncadd %s2736, %s2749
          %s2751 = smul.addr %s34, 16
          %s2752 = sadd.s32 %s35, %s2751
          %s2753 = smul.addr %s2752, 128
          %s2754 = scalar_lea.hbm %s11, %s2753
          %s2755 = sshll.u32 %s2739, 4
          %s2756 = int_to_ptr.vmem [resolvable:$true] %s2755
          %2761 = dma.vmem_to_hbm [thread:$0]  %s2756, 1024, %s2754, %s2736, 128, 256, 8
        $region72: #{tpu_custom_call.1} parent=63 // pred_fallthru
          _
        // Predicated region
        $region73: #{tpu_custom_call.1} parent=63 // pred_check
          %p2762 = pneg %p326
        $region74: #{tpu_custom_call.1} parent=63 // pred_check_branch
          %2764 = sbr.rel (%p2762) target = $region76
        $region75: #{tpu_custom_call.1} parent=63 // pred_region
          %s2766 = ssub.s32 4096, 4096
          %2767 = vsyncadd %s2741, %s2766
          %s2768 = smul.addr %s34, 64
          %s2769 = sadd.s32 %s35, %s2768
          %s2770 = smul.addr %s2769, 128
          %s2771 = scalar_lea.hbm %s12, %s2770
          %s2772 = sshll.u32 %s2744, 4
          %s2773 = int_to_ptr.vmem [resolvable:$true] %s2772
          %2778 = dma.vmem_to_hbm [thread:$0]  %s2773, 4096, %s2771, %s2741, 128, 256, 8
        $region76: #{tpu_custom_call.1} parent=63 // pred_fallthru
          _
      $region64: #{tpu_custom_call.1} parent=5 // pred_fallthru
        _
      %p2779 = scmp.le.s32.totalorder 2, %s25
      // Predicated region
      $region77: #{tpu_custom_call.1} parent=5 // pred_check
        %p2780 = pneg %p2779
      $region78: #{tpu_custom_call.1} parent=5 // pred_check_branch
        %2782 = sbr.rel (%p2780) target = $region80
      $region79: #{tpu_custom_call.1} parent=5 // pred_region
        %s2783 = ssub.s32 %s25, 2
        // Predicated region
        $region81: #{tpu_custom_call.1} parent=79 // pred_check
          %p2784 = pneg %p304
        $region82: #{tpu_custom_call.1} parent=79 // pred_check_branch
          %2786 = sbr.rel (%p2784) target = $region84
        $region83: #{tpu_custom_call.1} parent=79 // pred_region
          %s2787 = sand.u32 %s289, 1
          %s2788 = scalar_lea.sflag [#allocation5], %s2787
          %s2789 = sand.u32 %s289, 1
          %s2790 = smul.addr %s2789, 64
          %s2791 = scalar_lea.vmem [#allocation4], %s2790
          %2792 = dma.done %s2788, 1024
        $region84: #{tpu_custom_call.1} parent=79 // pred_fallthru
          _
        // Predicated region
        $region85: #{tpu_custom_call.1} parent=79 // pred_check
          %p2793 = pneg %p332
        $region86: #{tpu_custom_call.1} parent=79 // pred_check_branch
          %2795 = sbr.rel (%p2793) target = $region88
        $region87: #{tpu_custom_call.1} parent=79 // pred_region
          %s2796 = sand.u32 %s317, 1
          %s2797 = scalar_lea.sflag [#allocation7], %s2796
          %s2798 = sand.u32 %s317, 1
          %s2799 = smul.addr %s2798, 256
          %s2800 = scalar_lea.vmem [#allocation6], %s2799
          %2801 = dma.done %s2797, 4096
        $region88: #{tpu_custom_call.1} parent=79 // pred_fallthru
          _
      $region80: #{tpu_custom_call.1} parent=5 // pred_fallthru
        _
    $region6: #{tpu_custom_call.1} parent=1 // loop_footer
      %s29 = sadd.s32 1, %s25
    $region7: #{tpu_custom_call.1} parent=1 // loop_footer_branch
      %24 = sbr.rel target = $region3
    $region8: #{tpu_custom_call.1} parent=1 // loop_exit
      _
    %2802 = vsyncpa [#allocation5], 1
    %s2803 = scalar_lea.sflag [#allocation5], 1
    %2804 = vsyncpa %s2803, 1
    %2805 = vsyncpa [#allocation7], 1
    %s2806 = scalar_lea.sflag [#allocation7], 1
    %2807 = vsyncpa %s2806, 1

</llo_original>
